<compile_context>
chip_gen: v6e
topology: v6e:2x2x1
jax: 0.10.0
libtpu: 0.0.40
codegen_flags: <defaults>
</compile_context>

<pallas_src>
import jax
import jax.numpy as jnp
import numpy as np
from jax.experimental import pallas as pl
from jax.experimental.pallas import tpu as pltpu

BN_EPS = 1e-5


# --------------------------------- kernel ----------------------------------

def make_scarnet_kernel(seq_len, block_b):
    L = seq_len
    BB = block_b

    def shift_slabs(h):
        """h: (T*BB, C), rows ordered (t, b)-major.  Returns (prev, nxt) = h
        shifted by +-1 time slab, zero-padded at the sequence edges.  Pure
        static, sublane-aligned slab slices + concat (no rolls, no masks)."""
        n, c = h.shape
        z = jnp.zeros((BB, c), h.dtype)
        prev = jnp.concatenate([z, h[:n - BB, :]], axis=0)
        nxt = jnp.concatenate([h[BB:, :], z], axis=0)
        return prev, nxt

    def conv_bn_relu(h, w_ref, shift_ref):
        """Conv1d(k=3, pad=1) + folded inference BatchNorm + ReLU as a single
        K = 3*Cin matmul (BN scale folded into w, conv bias into shift)."""
        prev, nxt = shift_slabs(h)
        taps = jnp.concatenate([prev, h, nxt], axis=1)          # (N, 3*Cin)
        w = w_ref[...]
        y = jnp.dot(taps.astype(w.dtype), w, preferred_element_type=jnp.float32)
        return jnp.maximum(y + shift_ref[...], 0.0)

    def maxpool2(h):
        """MaxPool1d(2) over time: pairwise max of adjacent time slabs.  The
        number of pairs is a tiny compile-time constant -> unrolled slab maxes."""
        n, c = h.shape
        pairs = n // (2 * BB)
        outs = [
            jnp.maximum(h[(2 * p) * BB:(2 * p + 1) * BB, :],
                        h[(2 * p + 1) * BB:(2 * p + 2) * BB, :])
            for p in range(pairs)
        ]
        return outs[0] if pairs == 1 else jnp.concatenate(outs, axis=0)

    def kernel(x_ref,
               w1, sh1,
               w2, sh2,
               w3, sh3,
               w4, sh4,
               fw1, fb1,
               fw2, fb2,
               o_ref):
        x = x_ref[...]                                           # (BB*L, 1)

        # conv1 (Cin=1): three VPU broadcast-FMA taps; bias + BN folded into sh1.
        xp, xn = shift_slabs(x)
        h = xp * w1[0:1, :] + x * w1[1:2, :] + xn * w1[2:3, :] + sh1[...]
        h = jnp.maximum(h, 0.0)                                  # (BB*L, nf)

        h = conv_bn_relu(h, w2, sh2)                             # (BB*L, 2nf)
        h = maxpool2(h)                                          # (BB*L/2, 2nf)
        h = conv_bn_relu(h, w3, sh3)                             # (BB*L/2, 4nf)
        h = conv_bn_relu(h, w4, sh4)                             # (BB*L/2, 8nf)
        h = maxpool2(h)                                          # (BB*L/4, 8nf): 2 slabs

        # fc1: torch's channel-major flatten == [h(t=0), h(t=1)] lane-concat
        # against the column-split weight.  Positions are contiguous slabs.
        z = jnp.concatenate([h[:BB, :], h[BB:, :]], axis=1)      # (BB, 16nf)
        fw = fw1[...]
        z = jnp.dot(z.astype(fw.dtype), fw, preferred_element_type=jnp.float32)
        z = jnp.maximum(z + fb1[...], 0.0)
        # Dropout(p=0.3): identity at inference time.

        # fc2 padded to 128 output lanes for an unmasked lane-dense store; the
        # real scalar result lives in column 0 (sliced in the wrapper).
        fw2v = fw2[...]
        o_ref[...] = (jnp.dot(z.astype(fw2v.dtype), fw2v,
                              preferred_element_type=jnp.float32) + fb2[...])

    return kernel


# ------------------------------ JAX wrapper ---------------------------------

def make_torch_params(key, num_filters=32, kernel_size=3):
    """Deterministic synthetic parameters in PyTorch layout."""
    nf = num_filters
    chans = [(1, nf), (nf, 2 * nf), (2 * nf, 4 * nf), (4 * nf, 8 * nf)]
    keys = jax.random.split(key, 32)
    ki = iter(keys)
    p = {}
    for i, (cin, cout) in enumerate(chans, start=1):
        p[f"conv{i}_w"] = 0.1 * jax.random.normal(next(ki), (cout, cin, kernel_size), jnp.float32)
        p[f"conv{i}_b"] = 0.1 * jax.random.normal(next(ki), (cout,), jnp.float32)
        p[f"bn{i}_gamma"] = jax.random.uniform(next(ki), (cout,), jnp.float32, 0.8, 1.2)
        p[f"bn{i}_beta"] = 0.1 * jax.random.normal(next(ki), (cout,), jnp.float32)
        p[f"bn{i}_mean"] = 0.1 * jax.random.normal(next(ki), (cout,), jnp.float32)
        p[f"bn{i}_var"] = jax.random.uniform(next(ki), (cout,), jnp.float32, 0.5, 1.5)
    fc1_in = nf * 8 * 2   # = 8*nf channels * (input_size // 4) positions -> input_size = 8
    p["fc1_w"] = 0.05 * jax.random.normal(next(ki), (128, fc1_in), jnp.float32)
    p["fc1_b"] = 0.05 * jax.random.normal(next(ki), (128,), jnp.float32)
    p["fc2_w"] = 0.05 * jax.random.normal(next(ki), (1, 128), jnp.float32)
    p["fc2_b"] = 0.05 * jax.random.normal(next(ki), (1,), jnp.float32)
    return p


def to_kernel_params(p, use_bf16=False):
    """Torch-layout params -> kernel layout: tap-stacked (3*Cin, Cout) conv
    weights with BN scale folded in, one folded shift per conv, position-split
    fc1 stacked along K, lane-padded fc2.  use_bf16 casts matmul weights."""
    mm_dtype = jnp.bfloat16 if use_bf16 else jnp.float32
    args = []
    for i in range(1, 5):
        w = p[f"conv{i}_w"]                               # (Cout, Cin, 3)
        cout = w.shape[0]
        scale = p[f"bn{i}_gamma"] / jnp.sqrt(p[f"bn{i}_var"] + BN_EPS)
        shift = p[f"bn{i}_beta"] + (p[f"conv{i}_b"] - p[f"bn{i}_mean"]) * scale
        # Tap order [prev, center, next] must match the kernel's concat order.
        wt = jnp.concatenate([w[:, :, k].T for k in range(3)], axis=0) * scale[None, :]
        if i == 1:
            args.append(wt.astype(jnp.float32))           # (3, nf): VPU path, keep f32
        else:
            args.append(wt.astype(mm_dtype))              # (3*Cin, Cout)
        args.append(shift.reshape(1, cout).astype(jnp.float32))
    # fc1: torch flattens (B, C4, 2) channel-major -> columns 0::2 multiply the
    # t=0 position, 1::2 the t=1 position; stack them along K.
    fw1 = p["fc1_w"]                                      # (128, 2*C4)
    fw1k = jnp.concatenate([fw1[:, 0::2].T, fw1[:, 1::2].T], axis=0)   # (2*C4, 128)
    args += [fw1k.astype(mm_dtype), p["fc1_b"].reshape(1, 128).astype(jnp.float32)]
    # fc2 padded to a lane-dense 128-wide output; column 0 carries the result.
    fw2p = jnp.zeros((128, 128), jnp.float32).at[:, 0].set(p["fc2_w"][0]).astype(mm_dtype)
    fb2p = jnp.zeros((1, 128), jnp.float32).at[0, 0].set(p["fc2_b"][0])
    args += [fw2p, fb2p]
    return tuple(args)


def scarnet_forward(x, kernel_args, *, block_b=None, vmem_limit_bytes=None):
    B, L = x.shape
    assert L % 4 == 0 and L // 4 == 2, "fc1 in_features fixes input_size // 4 == 2"
    if block_b is None:
        # Keep >= 2 grid steps so both v7x TensorCores get work, while making
        # each matmul as tall (M) as the batch allows on v5e/v6e.
        block_b = B // 2 if (B % 16 == 0) else B
    assert B % block_b == 0 and block_b % 8 == 0
    nb = B // block_b
    n_rows = block_b * L

    kernel = make_scarnet_kernel(L, block_b)
    # (t, b)-major row order inside each batch block.
    x_tb = x.reshape(nb, block_b, L).transpose(0, 2, 1).reshape(nb * n_rows, 1)

    # Weights: full arrays, constant index_map -> resident across grid steps.
    w_specs = [pl.BlockSpec(a.shape, lambda i: (0, 0)) for a in kernel_args]

    nf = kernel_args[0].shape[1]
    flops = (2 * B * L * 3 * nf                                # conv1 (VPU)
             + 2 * B * L * (3 * nf) * (2 * nf)                 # conv2
             + 2 * (B * L // 2) * (3 * 2 * nf) * (4 * nf)      # conv3
             + 2 * (B * L // 2) * (3 * 4 * nf) * (8 * nf)      # conv4
             + 2 * B * (16 * nf) * 128                         # fc1
             + 2 * B * 128 * 128)                              # fc2
    bytes_accessed = (x_tb.size * x_tb.dtype.itemsize
                      + sum(int(a.size) * a.dtype.itemsize for a in kernel_args)
                      + B * 128 * 4)

    out = pl.pallas_call(
        kernel,
        out_shape=jax.ShapeDtypeStruct((B, 128), jnp.float32),
        grid=(nb,),
        in_specs=[pl.BlockSpec((n_rows, 1), lambda i: (i, 0))] + w_specs,
        out_specs=pl.BlockSpec((block_b, 128), lambda i: (i, 0)),
        compiler_params=pltpu.CompilerParams(
            dimension_semantics=("parallel",),
            vmem_limit_bytes=vmem_limit_bytes),
        cost_estimate=pl.CostEstimate(flops=int(flops), transcendentals=0,
                                      bytes_accessed=int(bytes_accessed)),
    )(x_tb, *kernel_args)
    return out[:, :1]                                     # lane-dense store, slice col 0


# --------------------------- pure-JAX reference ------------------------------

def ref_forward(x, p):
    h = x[:, None, :]                                     # (B, 1, L)  NCL

    def conv(h, w, b):
        y = jax.lax.conv_general_dilated(
            h, w, window_strides=(1,), padding=((1, 1),),
            dimension_numbers=("NCH", "OIH", "NCH"))
        return y + b[None, :, None]

    def bn(h, i):
        g, bta = p[f"bn{i}_gamma"], p[f"bn{i}_beta"]
        m, v = p[f"bn{i}_mean"], p[f"bn{i}_var"]
        return (h - m[None, :, None]) / jnp.sqrt(v[None, :, None] + BN_EPS) \
            * g[None, :, None] + bta[None, :, None]

    def pool(h):
        return jnp.maximum(h[:, :, 0::2], h[:, :, 1::2])

    h = jax.nn.relu(bn(conv(h, p["conv1_w"], p["conv1_b"]), 1))
    h = jax.nn.relu(bn(conv(h, p["conv2_w"], p["conv2_b"]), 2))
    h = pool(h)
    h = jax.nn.relu(bn(conv(h, p["conv3_w"], p["conv3_b"]), 3))
    h = jax.nn.relu(bn(conv(h, p["conv4_w"], p["conv4_b"]), 4))
    h = pool(h)
    h = h.reshape(h.shape[0], -1)                         # channel-major flatten
    h = jax.nn.relu(h @ p["fc1_w"].T + p["fc1_b"])
    return h @ p["fc2_w"].T + p["fc2_b"]


# ----------------------------------- main ------------------------------------

if __name__ == "__main__":
    # fc1 in_features = num_filters*8*2 forces input_size // 4 == 2 -> input_size = 8.
    B, INPUT_SIZE, NUM_FILTERS = 64, 8, 32
    B_BLK = 32   # grid = 2 "parallel" steps: both v7x TensorCores get a block

    key = jax.random.PRNGKey(0)
    kx, kp = jax.random.split(key)
    x = jax.random.normal(kx, (B, INPUT_SIZE), jnp.float32)

    torch_params = make_torch_params(kp, num_filters=NUM_FILTERS)
    # use_bf16=True gives single-pass bf16 MXU (big win on v5e) but loosens the
    # tolerance to ~1e-2; keep the f32 path here so the 1e-4 check holds.
    kernel_args = to_kernel_params(torch_params, use_bf16=False)

    out = scarnet_forward(x, kernel_args, block_b=B_BLK)
    out = jax.block_until_ready(out)

    ref = jax.block_until_ready(ref_forward(x, torch_params))
    np.testing.assert_allclose(np.asarray(out), np.asarray(ref), rtol=1e-4, atol=1e-4)

    print("KERNEL_OK")
</pallas_src>

<mosaic_0001>
module attributes {stable_mosaic.version = 11 : i64} {
  func.func @kernel(%arg0: i32, %arg1: memref<256x1xf32, #tpu.memory_space<vmem>>, %arg2: memref<3x32xf32, #tpu.memory_space<vmem>>, %arg3: memref<1x32xf32, #tpu.memory_space<vmem>>, %arg4: memref<96x64xf32, #tpu.memory_space<vmem>>, %arg5: memref<1x64xf32, #tpu.memory_space<vmem>>, %arg6: memref<192x128xf32, #tpu.memory_space<vmem>>, %arg7: memref<1x128xf32, #tpu.memory_space<vmem>>, %arg8: memref<384x256xf32, #tpu.memory_space<vmem>>, %arg9: memref<1x256xf32, #tpu.memory_space<vmem>>, %arg10: memref<512x128xf32, #tpu.memory_space<vmem>>, %arg11: memref<1x128xf32, #tpu.memory_space<vmem>>, %arg12: memref<128x128xf32, #tpu.memory_space<vmem>>, %arg13: memref<1x128xf32, #tpu.memory_space<vmem>>, %arg14: memref<32x128xf32, #tpu.memory_space<vmem>>) attributes {dimension_semantics = [#tpu.dimension_semantics<parallel>], iteration_bounds = array<i64: 2>, scalar_prefetch = 0 : i64, scratch_operands = 0 : i64, tpu.core_type = #tpu.core_type<tc>, window_params = [{transform_indices = @transform_0, window_bounds = array<i64: 256, 1>}, {pipeline_mode = #tpu.pipeline_mode<synchronous>, transform_indices = @transform_1, window_bounds = array<i64: 3, 32>}, {pipeline_mode = #tpu.pipeline_mode<synchronous>, transform_indices = @transform_2, window_bounds = array<i64: 1, 32>}, {pipeline_mode = #tpu.pipeline_mode<synchronous>, transform_indices = @transform_3, window_bounds = array<i64: 96, 64>}, {pipeline_mode = #tpu.pipeline_mode<synchronous>, transform_indices = @transform_4, window_bounds = array<i64: 1, 64>}, {pipeline_mode = #tpu.pipeline_mode<synchronous>, transform_indices = @transform_5, window_bounds = array<i64: 192, 128>}, {pipeline_mode = #tpu.pipeline_mode<synchronous>, transform_indices = @transform_6, window_bounds = array<i64: 1, 128>}, {pipeline_mode = #tpu.pipeline_mode<synchronous>, transform_indices = @transform_7, window_bounds = array<i64: 384, 256>}, {pipeline_mode = #tpu.pipeline_mode<synchronous>, transform_indices = @transform_8, window_bounds = array<i64: 1, 256>}, {pipeline_mode = #tpu.pipeline_mode<synchronous>, transform_indices = @transform_9, window_bounds = array<i64: 512, 128>}, {pipeline_mode = #tpu.pipeline_mode<synchronous>, transform_indices = @transform_10, window_bounds = array<i64: 1, 128>}, {pipeline_mode = #tpu.pipeline_mode<synchronous>, transform_indices = @transform_11, window_bounds = array<i64: 128, 128>}, {pipeline_mode = #tpu.pipeline_mode<synchronous>, transform_indices = @transform_12, window_bounds = array<i64: 1, 128>}, {transform_indices = @transform_13, window_bounds = array<i64: 32, 128>}]} {
    %c0 = arith.constant 0 : index
    %c0_0 = arith.constant 0 : index
    %0 = vector.load %arg1[%c0, %c0_0] : memref<256x1xf32, #tpu.memory_space<vmem>>, vector<256x1xf32>
    %cst = arith.constant 0.000000e+00 : f32
    %1 = vector.broadcast %cst : f32 to vector<32x1xf32>
    %2 = vector.extract_strided_slice %0 {offsets = [0, 0], sizes = [224, 1], strides = [1, 1]} : vector<256x1xf32> to vector<224x1xf32>
    %3 = tpu.concatenate %1, %2 in 0 : vector<32x1xf32>, vector<224x1xf32> -> vector<256x1xf32>
    %4 = vector.extract_strided_slice %0 {offsets = [32, 0], sizes = [224, 1], strides = [1, 1]} : vector<256x1xf32> to vector<224x1xf32>
    %5 = tpu.concatenate %4, %1 in 0 : vector<224x1xf32>, vector<32x1xf32> -> vector<256x1xf32>
    %c0_1 = arith.constant 0 : index
    %c0_2 = arith.constant 0 : index
    %6 = vector.load %arg2[%c0_1, %c0_2] : memref<3x32xf32, #tpu.memory_space<vmem>>, vector<1x32xf32>
    %7 = vector.broadcast %3 : vector<256x1xf32> to vector<256x32xf32>
    %8 = vector.broadcast %6 : vector<1x32xf32> to vector<256x32xf32>
    %9 = arith.mulf %7, %8 : vector<256x32xf32>
    %c1 = arith.constant 1 : index
    %c0_3 = arith.constant 0 : index
    %10 = vector.load %arg2[%c1, %c0_3] : memref<3x32xf32, #tpu.memory_space<vmem>>, vector<1x32xf32>
    %11 = vector.broadcast %0 : vector<256x1xf32> to vector<256x32xf32>
    %12 = vector.broadcast %10 : vector<1x32xf32> to vector<256x32xf32>
    %13 = arith.mulf %11, %12 : vector<256x32xf32>
    %14 = arith.addf %9, %13 : vector<256x32xf32>
    %c2 = arith.constant 2 : index
    %c0_4 = arith.constant 0 : index
    %15 = vector.load %arg2[%c2, %c0_4] : memref<3x32xf32, #tpu.memory_space<vmem>>, vector<1x32xf32>
    %16 = vector.broadcast %5 : vector<256x1xf32> to vector<256x32xf32>
    %17 = vector.broadcast %15 : vector<1x32xf32> to vector<256x32xf32>
    %18 = arith.mulf %16, %17 : vector<256x32xf32>
    %19 = arith.addf %14, %18 : vector<256x32xf32>
    %c0_5 = arith.constant 0 : index
    %c0_6 = arith.constant 0 : index
    %20 = vector.load %arg3[%c0_5, %c0_6] : memref<1x32xf32, #tpu.memory_space<vmem>>, vector<1x32xf32>
    %21 = vector.broadcast %20 : vector<1x32xf32> to vector<256x32xf32>
    %22 = arith.addf %19, %21 : vector<256x32xf32>
    %cst_7 = arith.constant 0.000000e+00 : f32
    %23 = vector.broadcast %cst_7 : f32 to vector<256x32xf32>
    %24 = arith.maximumf %22, %23 : vector<256x32xf32>
    %cst_8 = arith.constant 0.000000e+00 : f32
    %25 = vector.broadcast %cst_8 : f32 to vector<32x32xf32>
    %26 = vector.extract_strided_slice %24 {offsets = [0, 0], sizes = [224, 32], strides = [1, 1]} : vector<256x32xf32> to vector<224x32xf32>
    %27 = tpu.concatenate %25, %26 in 0 : vector<32x32xf32>, vector<224x32xf32> -> vector<256x32xf32>
    %28 = vector.extract_strided_slice %24 {offsets = [32, 0], sizes = [224, 32], strides = [1, 1]} : vector<256x32xf32> to vector<224x32xf32>
    %29 = tpu.concatenate %28, %25 in 0 : vector<224x32xf32>, vector<32x32xf32> -> vector<256x32xf32>
    %30 = tpu.concatenate %27, %24, %29 in 1 : vector<256x32xf32>, vector<256x32xf32>, vector<256x32xf32> -> vector<256x96xf32>
    %c0_9 = arith.constant 0 : index
    %c0_10 = arith.constant 0 : index
    %31 = vector.load %arg4[%c0_9, %c0_10] : memref<96x64xf32, #tpu.memory_space<vmem>>, vector<96x64xf32>
    %cst_11 = arith.constant dense<0.000000e+00> : vector<256x64xf32>
    %32 = tpu.matmul %30, %31, %cst_11 {dimension_numbers = #tpu.dot_dimension_numbers<[1], [0], [0], [1], [0, 0, 1, 1], [], []>} : vector<256x96xf32>, vector<96x64xf32>, vector<256x64xf32> -> vector<256x64xf32>
    %c0_12 = arith.constant 0 : index
    %c0_13 = arith.constant 0 : index
    %33 = vector.load %arg5[%c0_12, %c0_13] : memref<1x64xf32, #tpu.memory_space<vmem>>, vector<1x64xf32>
    %34 = vector.broadcast %33 : vector<1x64xf32> to vector<256x64xf32>
    %35 = arith.addf %32, %34 : vector<256x64xf32>
    %cst_14 = arith.constant 0.000000e+00 : f32
    %36 = vector.broadcast %cst_14 : f32 to vector<256x64xf32>
    %37 = arith.maximumf %35, %36 : vector<256x64xf32>
    %38 = vector.extract_strided_slice %37 {offsets = [0, 0], sizes = [32, 64], strides = [1, 1]} : vector<256x64xf32> to vector<32x64xf32>
    %39 = vector.extract_strided_slice %37 {offsets = [32, 0], sizes = [32, 64], strides = [1, 1]} : vector<256x64xf32> to vector<32x64xf32>
    %40 = arith.maximumf %38, %39 : vector<32x64xf32>
    %41 = vector.extract_strided_slice %37 {offsets = [64, 0], sizes = [32, 64], strides = [1, 1]} : vector<256x64xf32> to vector<32x64xf32>
    %42 = vector.extract_strided_slice %37 {offsets = [96, 0], sizes = [32, 64], strides = [1, 1]} : vector<256x64xf32> to vector<32x64xf32>
    %43 = arith.maximumf %41, %42 : vector<32x64xf32>
    %44 = vector.extract_strided_slice %37 {offsets = [128, 0], sizes = [32, 64], strides = [1, 1]} : vector<256x64xf32> to vector<32x64xf32>
    %45 = vector.extract_strided_slice %37 {offsets = [160, 0], sizes = [32, 64], strides = [1, 1]} : vector<256x64xf32> to vector<32x64xf32>
    %46 = arith.maximumf %44, %45 : vector<32x64xf32>
    %47 = vector.extract_strided_slice %37 {offsets = [192, 0], sizes = [32, 64], strides = [1, 1]} : vector<256x64xf32> to vector<32x64xf32>
    %48 = vector.extract_strided_slice %37 {offsets = [224, 0], sizes = [32, 64], strides = [1, 1]} : vector<256x64xf32> to vector<32x64xf32>
    %49 = arith.maximumf %47, %48 : vector<32x64xf32>
    %50 = tpu.concatenate %40, %43, %46, %49 in 0 : vector<32x64xf32>, vector<32x64xf32>, vector<32x64xf32>, vector<32x64xf32> -> vector<128x64xf32>
    %cst_15 = arith.constant 0.000000e+00 : f32
    %51 = vector.broadcast %cst_15 : f32 to vector<32x64xf32>
    %52 = vector.extract_strided_slice %50 {offsets = [0, 0], sizes = [96, 64], strides = [1, 1]} : vector<128x64xf32> to vector<96x64xf32>
    %53 = tpu.concatenate %51, %52 in 0 : vector<32x64xf32>, vector<96x64xf32> -> vector<128x64xf32>
    %54 = vector.extract_strided_slice %50 {offsets = [32, 0], sizes = [96, 64], strides = [1, 1]} : vector<128x64xf32> to vector<96x64xf32>
    %55 = tpu.concatenate %54, %51 in 0 : vector<96x64xf32>, vector<32x64xf32> -> vector<128x64xf32>
    %56 = tpu.concatenate %53, %50, %55 in 1 : vector<128x64xf32>, vector<128x64xf32>, vector<128x64xf32> -> vector<128x192xf32>
    %c0_16 = arith.constant 0 : index
    %c0_17 = arith.constant 0 : index
    %57 = vector.load %arg6[%c0_16, %c0_17] : memref<192x128xf32, #tpu.memory_space<vmem>>, vector<192x128xf32>
    %cst_18 = arith.constant dense<0.000000e+00> : vector<128x128xf32>
    %58 = tpu.matmul %56, %57, %cst_18 {dimension_numbers = #tpu.dot_dimension_numbers<[1], [0], [0], [1], [0, 0, 1, 1], [], []>} : vector<128x192xf32>, vector<192x128xf32>, vector<128x128xf32> -> vector<128x128xf32>
    %c0_19 = arith.constant 0 : index
    %c0_20 = arith.constant 0 : index
    %59 = vector.load %arg7[%c0_19, %c0_20] : memref<1x128xf32, #tpu.memory_space<vmem>>, vector<1x128xf32>
    %60 = vector.broadcast %59 : vector<1x128xf32> to vector<128x128xf32>
    %61 = arith.addf %58, %60 : vector<128x128xf32>
    %cst_21 = arith.constant 0.000000e+00 : f32
    %62 = vector.broadcast %cst_21 : f32 to vector<128x128xf32>
    %63 = arith.maximumf %61, %62 : vector<128x128xf32>
    %cst_22 = arith.constant 0.000000e+00 : f32
    %64 = vector.broadcast %cst_22 : f32 to vector<32x128xf32>
    %65 = vector.extract_strided_slice %63 {offsets = [0, 0], sizes = [96, 128], strides = [1, 1]} : vector<128x128xf32> to vector<96x128xf32>
    %66 = tpu.concatenate %64, %65 in 0 : vector<32x128xf32>, vector<96x128xf32> -> vector<128x128xf32>
    %67 = vector.extract_strided_slice %63 {offsets = [32, 0], sizes = [96, 128], strides = [1, 1]} : vector<128x128xf32> to vector<96x128xf32>
    %68 = tpu.concatenate %67, %64 in 0 : vector<96x128xf32>, vector<32x128xf32> -> vector<128x128xf32>
    %69 = tpu.concatenate %66, %63, %68 in 1 : vector<128x128xf32>, vector<128x128xf32>, vector<128x128xf32> -> vector<128x384xf32>
    %c0_23 = arith.constant 0 : index
    %c0_24 = arith.constant 0 : index
    %70 = vector.load %arg8[%c0_23, %c0_24] : memref<384x256xf32, #tpu.memory_space<vmem>>, vector<384x256xf32>
    %cst_25 = arith.constant dense<0.000000e+00> : vector<128x256xf32>
    %71 = tpu.matmul %69, %70, %cst_25 {dimension_numbers = #tpu.dot_dimension_numbers<[1], [0], [0], [1], [0, 0, 1, 1], [], []>} : vector<128x384xf32>, vector<384x256xf32>, vector<128x256xf32> -> vector<128x256xf32>
    %c0_26 = arith.constant 0 : index
    %c0_27 = arith.constant 0 : index
    %72 = vector.load %arg9[%c0_26, %c0_27] : memref<1x256xf32, #tpu.memory_space<vmem>>, vector<1x256xf32>
    %73 = vector.broadcast %72 : vector<1x256xf32> to vector<128x256xf32>
    %74 = arith.addf %71, %73 : vector<128x256xf32>
    %cst_28 = arith.constant 0.000000e+00 : f32
    %75 = vector.broadcast %cst_28 : f32 to vector<128x256xf32>
    %76 = arith.maximumf %74, %75 : vector<128x256xf32>
    %77 = vector.extract_strided_slice %76 {offsets = [0, 0], sizes = [32, 256], strides = [1, 1]} : vector<128x256xf32> to vector<32x256xf32>
    %78 = vector.extract_strided_slice %76 {offsets = [32, 0], sizes = [32, 256], strides = [1, 1]} : vector<128x256xf32> to vector<32x256xf32>
    %79 = arith.maximumf %77, %78 : vector<32x256xf32>
    %80 = vector.extract_strided_slice %76 {offsets = [64, 0], sizes = [32, 256], strides = [1, 1]} : vector<128x256xf32> to vector<32x256xf32>
    %81 = vector.extract_strided_slice %76 {offsets = [96, 0], sizes = [32, 256], strides = [1, 1]} : vector<128x256xf32> to vector<32x256xf32>
    %82 = arith.maximumf %80, %81 : vector<32x256xf32>
    %83 = tpu.concatenate %79, %82 in 0 : vector<32x256xf32>, vector<32x256xf32> -> vector<64x256xf32>
    %84 = vector.extract_strided_slice %83 {offsets = [0, 0], sizes = [32, 256], strides = [1, 1]} : vector<64x256xf32> to vector<32x256xf32>
    %85 = vector.extract_strided_slice %83 {offsets = [32, 0], sizes = [32, 256], strides = [1, 1]} : vector<64x256xf32> to vector<32x256xf32>
    %86 = tpu.concatenate %84, %85 in 1 : vector<32x256xf32>, vector<32x256xf32> -> vector<32x512xf32>
    %c0_29 = arith.constant 0 : index
    %c0_30 = arith.constant 0 : index
    %87 = vector.load %arg10[%c0_29, %c0_30] : memref<512x128xf32, #tpu.memory_space<vmem>>, vector<512x128xf32>
    %cst_31 = arith.constant dense<0.000000e+00> : vector<32x128xf32>
    %88 = tpu.matmul %86, %87, %cst_31 {dimension_numbers = #tpu.dot_dimension_numbers<[1], [0], [0], [1], [0, 0, 1, 1], [], []>} : vector<32x512xf32>, vector<512x128xf32>, vector<32x128xf32> -> vector<32x128xf32>
    %c0_32 = arith.constant 0 : index
    %c0_33 = arith.constant 0 : index
    %89 = vector.load %arg11[%c0_32, %c0_33] : memref<1x128xf32, #tpu.memory_space<vmem>>, vector<1x128xf32>
    %90 = vector.broadcast %89 : vector<1x128xf32> to vector<32x128xf32>
    %91 = arith.addf %88, %90 : vector<32x128xf32>
    %cst_34 = arith.constant 0.000000e+00 : f32
    %92 = vector.broadcast %cst_34 : f32 to vector<32x128xf32>
    %93 = arith.maximumf %91, %92 : vector<32x128xf32>
    %c0_35 = arith.constant 0 : index
    %c0_36 = arith.constant 0 : index
    %94 = vector.load %arg12[%c0_35, %c0_36] : memref<128x128xf32, #tpu.memory_space<vmem>>, vector<128x128xf32>
    %cst_37 = arith.constant dense<0.000000e+00> : vector<32x128xf32>
    %95 = tpu.matmul %93, %94, %cst_37 {dimension_numbers = #tpu.dot_dimension_numbers<[1], [0], [0], [1], [0, 0, 1, 1], [], []>} : vector<32x128xf32>, vector<128x128xf32>, vector<32x128xf32> -> vector<32x128xf32>
    %c0_38 = arith.constant 0 : index
    %c0_39 = arith.constant 0 : index
    %96 = vector.load %arg13[%c0_38, %c0_39] : memref<1x128xf32, #tpu.memory_space<vmem>>, vector<1x128xf32>
    %97 = vector.broadcast %96 : vector<1x128xf32> to vector<32x128xf32>
    %98 = arith.addf %95, %97 : vector<32x128xf32>
    %c0_40 = arith.constant 0 : index
    %c0_41 = arith.constant 0 : index
    %99 = vector.load %arg14[%c0_40, %c0_41] : memref<32x128xf32, #tpu.memory_space<vmem>>, vector<32x128xf32>
    tpu.vector_store %arg14[%c0_40, %c0_41], %98 {strides = array<i32>} : memref<32x128xf32, #tpu.memory_space<vmem>>, vector<32x128xf32>,
    return
  }
  func.func @transform_0(%arg0: i32) -> (i32, i32) {
    %c0_i32 = arith.constant 0 : i32
    %c0_i32_0 = arith.constant 0 : i32
    return %arg0, %c0_i32 : i32, i32
  }
  func.func @transform_1(%arg0: i32) -> (i32, i32) {
    %c0_i32 = arith.constant 0 : i32
    %c0_i32_0 = arith.constant 0 : i32
    %c0_i32_1 = arith.constant 0 : i32
    return %c0_i32, %c0_i32_0 : i32, i32
  }
  func.func @transform_2(%arg0: i32) -> (i32, i32) {
    %c0_i32 = arith.constant 0 : i32
    %c0_i32_0 = arith.constant 0 : i32
    %c0_i32_1 = arith.constant 0 : i32
    return %c0_i32, %c0_i32_0 : i32, i32
  }
  func.func @transform_3(%arg0: i32) -> (i32, i32) {
    %c0_i32 = arith.constant 0 : i32
    %c0_i32_0 = arith.constant 0 : i32
    %c0_i32_1 = arith.constant 0 : i32
    return %c0_i32, %c0_i32_0 : i32, i32
  }
  func.func @transform_4(%arg0: i32) -> (i32, i32) {
    %c0_i32 = arith.constant 0 : i32
    %c0_i32_0 = arith.constant 0 : i32
    %c0_i32_1 = arith.constant 0 : i32
    return %c0_i32, %c0_i32_0 : i32, i32
  }
  func.func @transform_5(%arg0: i32) -> (i32, i32) {
    %c0_i32 = arith.constant 0 : i32
    %c0_i32_0 = arith.constant 0 : i32
    %c0_i32_1 = arith.constant 0 : i32
    return %c0_i32, %c0_i32_0 : i32, i32
  }
  func.func @transform_6(%arg0: i32) -> (i32, i32) {
    %c0_i32 = arith.constant 0 : i32
    %c0_i32_0 = arith.constant 0 : i32
    %c0_i32_1 = arith.constant 0 : i32
    return %c0_i32, %c0_i32_0 : i32, i32
  }
  func.func @transform_7(%arg0: i32) -> (i32, i32) {
    %c0_i32 = arith.constant 0 : i32
    %c0_i32_0 = arith.constant 0 : i32
    %c0_i32_1 = arith.constant 0 : i32
    return %c0_i32, %c0_i32_0 : i32, i32
  }
  func.func @transform_8(%arg0: i32) -> (i32, i32) {
    %c0_i32 = arith.constant 0 : i32
    %c0_i32_0 = arith.constant 0 : i32
    %c0_i32_1 = arith.constant 0 : i32
    return %c0_i32, %c0_i32_0 : i32, i32
  }
  func.func @transform_9(%arg0: i32) -> (i32, i32) {
    %c0_i32 = arith.constant 0 : i32
    %c0_i32_0 = arith.constant 0 : i32
    %c0_i32_1 = arith.constant 0 : i32
    return %c0_i32, %c0_i32_0 : i32, i32
  }
  func.func @transform_10(%arg0: i32) -> (i32, i32) {
    %c0_i32 = arith.constant 0 : i32
    %c0_i32_0 = arith.constant 0 : i32
    %c0_i32_1 = arith.constant 0 : i32
    return %c0_i32, %c0_i32_0 : i32, i32
  }
  func.func @transform_11(%arg0: i32) -> (i32, i32) {
    %c0_i32 = arith.constant 0 : i32
    %c0_i32_0 = arith.constant 0 : i32
    %c0_i32_1 = arith.constant 0 : i32
    return %c0_i32, %c0_i32_0 : i32, i32
  }
  func.func @transform_12(%arg0: i32) -> (i32, i32) {
    %c0_i32 = arith.constant 0 : i32
    %c0_i32_0 = arith.constant 0 : i32
    %c0_i32_1 = arith.constant 0 : i32
    return %c0_i32, %c0_i32_0 : i32, i32
  }
  func.func @transform_13(%arg0: i32) -> (i32, i32) {
    %c0_i32 = arith.constant 0 : i32
    %c0_i32_0 = arith.constant 0 : i32
    return %arg0, %c0_i32 : i32, i32
  }
}

</mosaic_0001>

<llo_original>
// kernel: tpu_custom_call.1
$region0: #{tpu_custom_call.1}
  #allocation0 [shape = 'u32[]', space=smem, size = 0x4, offset = 0x4, fixed_abs, tag = 'smem constant byte address 0x4 - core index']
  #allocation1 [shape = 'u32[144,128]{1,0:T(1,128)}', space=vmem, size = 0x12000, scoped, tag = 'internal scratch']
  %s0 = inlined_call_operand.vmem [shape: f32[512,1], index: 0, kind: input, shape index: {}]
  %s1 = inlined_call_operand.vmem [shape: f32[3,32], index: 1, kind: input, shape index: {}]
  %s2 = inlined_call_operand.vmem [shape: f32[1,32], index: 2, kind: input, shape index: {}]
  %s3 = inlined_call_operand.vmem [shape: f32[96,64], index: 3, kind: input, shape index: {}]
  %s4 = inlined_call_operand.vmem [shape: f32[1,64], index: 4, kind: input, shape index: {}]
  %s5 = inlined_call_operand.hbm [shape: f32[192,128], index: 5, kind: input, shape index: {}]
  %s6 = inlined_call_operand.vmem [shape: f32[1,128], index: 6, kind: input, shape index: {}]
  %s7 = inlined_call_operand.hbm [shape: f32[384,256], index: 7, kind: input, shape index: {}]
  %s8 = inlined_call_operand.vmem [shape: f32[1,256], index: 8, kind: input, shape index: {}]
  %s9 = inlined_call_operand.vmem [shape: f32[512,128], index: 9, kind: input, shape index: {}]
  %s10 = inlined_call_operand.vmem [shape: f32[1,128], index: 10, kind: input, shape index: {}]
  %s11 = inlined_call_operand.vmem [shape: f32[128,128], index: 11, kind: input, shape index: {}]
  %s12 = inlined_call_operand.vmem [shape: f32[1,128], index: 12, kind: input, shape index: {}]
  %s13 = inlined_call_operand.hbm [shape: f32[64,128], index: 13, kind: output, shape index: {}]
  %s14 = sld [smem:[#allocation0]]
  $region93: #{tpu_custom_call.1} parent=0
    _
  %s16 = ssub.s32 1, %s14
  %s17 = scalar_select 0, %s16, %s14
  $region1: #{tpu_custom_call.1} parent=0
    #allocation2 [shape = 'u8[98304]{0}', space=vmem, size = 0x18000, scoped, tag = 'input window, operand 5, single buffered']
    #allocation3 [shape = 's32[2]{0}', space=sflag, size = 0x8, scoped, tag = 'scoped memory for tpu_custom_call.1']
    #allocation4 [shape = 's32[2]{0}', space=sflag, size = 0x8, scoped, tag = 'scoped memory for tpu_custom_call.1']
    #allocation5 [shape = 'u8[393216]{0}', space=vmem, size = 0x60000, scoped, tag = 'input window, operand 7, single buffered']
    #allocation6 [shape = 's32[1]{0}', space=sflag, size = 0x4, scoped, tag = 'scoped memory for tpu_custom_call.1']
    #allocation7 [shape = 'u8[32768]{0}', space=vmem, size = 0x8000, scoped, tag = 'output window, operand 0']
    %18 = vsyncpa [#allocation3], 0
    %19 = vsyncpa [#allocation6], 0
    %20 = vsyncpa [#allocation4], 0
    %s21 = scalar_lea.sflag [#allocation4], 1
    %22 = vsyncpa %s21, 0
    loop: start=0, step=1, limit=4
    $region2: #{tpu_custom_call.1} parent=1 // loop_pre_header
      _
    $region3: #{tpu_custom_call.1} parent=1 // loop_header
      %s24 = sphi 0, %s28
      %p25 = scmp.ge.s32.totalorder %s24, 4
      %s34 = sphi 0, %s36
      %s37 = sphi 0, %s34
      %s38 = sphi 0, %s37
      %s54 = sphi 0, %s38
      %s58 = sphi 0, %s58
      %s60 = sphi 0, %s58
      %s61 = sphi 0, %s60
      %s75 = sphi 0, %s61
      %s79 = sphi 0, %s79
      %s81 = sphi 0, %s79
      %s82 = sphi 0, %s81
      %s96 = sphi 0, %s82
      %s100 = sphi 0, %s100
      %s102 = sphi 0, %s100
      %s103 = sphi 0, %s102
      %s117 = sphi 0, %s103
      %s121 = sphi 0, %s121
      %s123 = sphi 0, %s121
      %s124 = sphi 0, %s123
      %s138 = sphi 0, %s124
      %s142 = sphi 0, %s142
      %s144 = sphi 0, %s142
      %s145 = sphi 0, %s144
      %s159 = sphi 0, %s145
      %s163 = sphi 0, %s163
      %s165 = sphi 0, %s163
      %s166 = sphi 0, %s165
      %s180 = sphi 0, %s166
      %s184 = sphi 0, %s184
      %s186 = sphi 0, %s184
      %s187 = sphi 0, %s186
      %s201 = sphi 0, %s187
      %s205 = sphi 0, %s205
      %s207 = sphi 0, %s205
      %s208 = sphi 0, %s207
      %s222 = sphi 0, %s208
      %s226 = sphi 0, %s226
      %s228 = sphi 0, %s226
      %s229 = sphi 0, %s228
      %s243 = sphi 0, %s229
      %s247 = sphi 0, %s247
      %s249 = sphi 0, %s247
      %s250 = sphi 0, %s249
      %s264 = sphi 0, %s250
      %s268 = sphi 0, %s268
      %s270 = sphi 0, %s268
      %s271 = sphi 0, %s270
      %s285 = sphi 0, %s271
      %s289 = sphi 0, %s289
      %s291 = sphi 0, %s289
      %s292 = sphi 0, %s291
      %s306 = sphi 0, %s292
      %s312 = sphi 0, %s314
      %s315 = sphi 0, %s312
      %s316 = sphi 0, %s315
      %s332 = sphi 0, %s316
    $region4: #{tpu_custom_call.1} parent=1 // loop_header_branch
      %27 = sbr.rel (%p25) target = $region8
    $region5: #{tpu_custom_call.1} parent=1 // loop_body
      %s29 = ssub.s32 %s24, 1
      %s30 = ssub.s32 %s24, 2
      %s31 = sadd.s32 %s24, 1
      %s32 = ssub.s32 %s24, %s31
      %p33 = scmp.eq.s32.totalorder %s32, 0
      %s35 = sadd.s32 %s34, 1
      %s36 = scalar_select %p33, %s34, %s35
      %p39 = pneg %p33
      %p40 = scmp.eq.s32.totalorder %s24, 1
      %p41 = por %p39, %p40
      %p42 = scmp.ne.s32.totalorder %s34, %s37
      %p43 = scmp.eq.s32.totalorder %s24, 0
      %p44 = por %p42, %p43
      %p45 = scmp.ne.s32.totalorder %s34, %s37
      %p46 = scmp.eq.s32.totalorder %s29, 1
      %p47 = por %p45, %p46
      %p48 = scmp.ne.s32.totalorder %s37, %s38
      %p49 = scmp.eq.s32.totalorder %s29, 0
      %p50 = por %p48, %p49
      %p51 = scmp.ne.s32.totalorder %s37, %s38
      %p52 = scmp.eq.s32.totalorder %s30, 1
      %p53 = por %p51, %p52
      %p55 = scmp.ne.s32.totalorder %s38, %s54
      %p56 = scmp.eq.s32.totalorder %s30, 0
      %p57 = por %p55, %p56
      %s59 = sadd.s32 %s58, 1
      %p62 = scmp.eq.s32.totalorder %s24, 1
      %p63 = scmp.ne.s32.totalorder %s58, %s60
      %p64 = scmp.eq.s32.totalorder %s24, 0
      %p65 = por %p63, %p64
      %p66 = scmp.ne.s32.totalorder %s58, %s60
      %p67 = scmp.eq.s32.totalorder %s29, 1
      %p68 = por %p66, %p67
      %p69 = scmp.ne.s32.totalorder %s60, %s61
      %p70 = scmp.eq.s32.totalorder %s29, 0
      %p71 = por %p69, %p70
      %p72 = scmp.ne.s32.totalorder %s60, %s61
      %p73 = scmp.eq.s32.totalorder %s30, 1
      %p74 = por %p72, %p73
      %p76 = scmp.ne.s32.totalorder %s61, %s75
      %p77 = scmp.eq.s32.totalorder %s30, 0
      %p78 = por %p76, %p77
      %s80 = sadd.s32 %s79, 1
      %p83 = scmp.eq.s32.totalorder %s24, 1
      %p84 = scmp.ne.s32.totalorder %s79, %s81
      %p85 = scmp.eq.s32.totalorder %s24, 0
      %p86 = por %p84, %p85
      %p87 = scmp.ne.s32.totalorder %s79, %s81
      %p88 = scmp.eq.s32.totalorder %s29, 1
      %p89 = por %p87, %p88
      %p90 = scmp.ne.s32.totalorder %s81, %s82
      %p91 = scmp.eq.s32.totalorder %s29, 0
      %p92 = por %p90, %p91
      %p93 = scmp.ne.s32.totalorder %s81, %s82
      %p94 = scmp.eq.s32.totalorder %s30, 1
      %p95 = por %p93, %p94
      %p97 = scmp.ne.s32.totalorder %s82, %s96
      %p98 = scmp.eq.s32.totalorder %s30, 0
      %p99 = por %p97, %p98
      %s101 = sadd.s32 %s100, 1
      %p104 = scmp.eq.s32.totalorder %s24, 1
      %p105 = scmp.ne.s32.totalorder %s100, %s102
      %p106 = scmp.eq.s32.totalorder %s24, 0
      %p107 = por %p105, %p106
      %p108 = scmp.ne.s32.totalorder %s100, %s102
      %p109 = scmp.eq.s32.totalorder %s29, 1
      %p110 = por %p108, %p109
      %p111 = scmp.ne.s32.totalorder %s102, %s103
      %p112 = scmp.eq.s32.totalorder %s29, 0
      %p113 = por %p111, %p112
      %p114 = scmp.ne.s32.totalorder %s102, %s103
      %p115 = scmp.eq.s32.totalorder %s30, 1
      %p116 = por %p114, %p115
      %p118 = scmp.ne.s32.totalorder %s103, %s117
      %p119 = scmp.eq.s32.totalorder %s30, 0
      %p120 = por %p118, %p119
      %s122 = sadd.s32 %s121, 1
      %p125 = scmp.eq.s32.totalorder %s24, 1
      %p126 = scmp.ne.s32.totalorder %s121, %s123
      %p127 = scmp.eq.s32.totalorder %s24, 0
      %p128 = por %p126, %p127
      %p129 = scmp.ne.s32.totalorder %s121, %s123
      %p130 = scmp.eq.s32.totalorder %s29, 1
      %p131 = por %p129, %p130
      %p132 = scmp.ne.s32.totalorder %s123, %s124
      %p133 = scmp.eq.s32.totalorder %s29, 0
      %p134 = por %p132, %p133
      %p135 = scmp.ne.s32.totalorder %s123, %s124
      %p136 = scmp.eq.s32.totalorder %s30, 1
      %p137 = por %p135, %p136
      %p139 = scmp.ne.s32.totalorder %s124, %s138
      %p140 = scmp.eq.s32.totalorder %s30, 0
      %p141 = por %p139, %p140
      %s143 = sadd.s32 %s142, 1
      %p146 = scmp.eq.s32.totalorder %s24, 1
      %p147 = scmp.ne.s32.totalorder %s142, %s144
      %p148 = scmp.eq.s32.totalorder %s24, 0
      %p149 = por %p147, %p148
      %p150 = scmp.ne.s32.totalorder %s142, %s144
      %p151 = scmp.eq.s32.totalorder %s29, 1
      %p152 = por %p150, %p151
      %p153 = scmp.ne.s32.totalorder %s144, %s145
      %p154 = scmp.eq.s32.totalorder %s29, 0
      %p155 = por %p153, %p154
      %p156 = scmp.ne.s32.totalorder %s144, %s145
      %p157 = scmp.eq.s32.totalorder %s30, 1
      %p158 = por %p156, %p157
      %p160 = scmp.ne.s32.totalorder %s145, %s159
      %p161 = scmp.eq.s32.totalorder %s30, 0
      %p162 = por %p160, %p161
      %s164 = sadd.s32 %s163, 1
      %p167 = scmp.eq.s32.totalorder %s24, 1
      %p168 = scmp.ne.s32.totalorder %s163, %s165
      %p169 = scmp.eq.s32.totalorder %s24, 0
      %p170 = por %p168, %p169
      %p171 = scmp.ne.s32.totalorder %s163, %s165
      %p172 = scmp.eq.s32.totalorder %s29, 1
      %p173 = por %p171, %p172
      %p174 = scmp.ne.s32.totalorder %s165, %s166
      %p175 = scmp.eq.s32.totalorder %s29, 0
      %p176 = por %p174, %p175
      %p177 = scmp.ne.s32.totalorder %s165, %s166
      %p178 = scmp.eq.s32.totalorder %s30, 1
      %p179 = por %p177, %p178
      %p181 = scmp.ne.s32.totalorder %s166, %s180
      %p182 = scmp.eq.s32.totalorder %s30, 0
      %p183 = por %p181, %p182
      %s185 = sadd.s32 %s184, 1
      %p188 = scmp.eq.s32.totalorder %s24, 1
      %p189 = scmp.ne.s32.totalorder %s184, %s186
      %p190 = scmp.eq.s32.totalorder %s24, 0
      %p191 = por %p189, %p190
      %p192 = scmp.ne.s32.totalorder %s184, %s186
      %p193 = scmp.eq.s32.totalorder %s29, 1
      %p194 = por %p192, %p193
      %p195 = scmp.ne.s32.totalorder %s186, %s187
      %p196 = scmp.eq.s32.totalorder %s29, 0
      %p197 = por %p195, %p196
      %p198 = scmp.ne.s32.totalorder %s186, %s187
      %p199 = scmp.eq.s32.totalorder %s30, 1
      %p200 = por %p198, %p199
      %p202 = scmp.ne.s32.totalorder %s187, %s201
      %p203 = scmp.eq.s32.totalorder %s30, 0
      %p204 = por %p202, %p203
      %s206 = sadd.s32 %s205, 1
      %p209 = scmp.eq.s32.totalorder %s24, 1
      %p210 = scmp.ne.s32.totalorder %s205, %s207
      %p211 = scmp.eq.s32.totalorder %s24, 0
      %p212 = por %p210, %p211
      %p213 = scmp.ne.s32.totalorder %s205, %s207
      %p214 = scmp.eq.s32.totalorder %s29, 1
      %p215 = por %p213, %p214
      %p216 = scmp.ne.s32.totalorder %s207, %s208
      %p217 = scmp.eq.s32.totalorder %s29, 0
      %p218 = por %p216, %p217
      %p219 = scmp.ne.s32.totalorder %s207, %s208
      %p220 = scmp.eq.s32.totalorder %s30, 1
      %p221 = por %p219, %p220
      %p223 = scmp.ne.s32.totalorder %s208, %s222
      %p224 = scmp.eq.s32.totalorder %s30, 0
      %p225 = por %p223, %p224
      %s227 = sadd.s32 %s226, 1
      %p230 = scmp.eq.s32.totalorder %s24, 1
      %p231 = scmp.ne.s32.totalorder %s226, %s228
      %p232 = scmp.eq.s32.totalorder %s24, 0
      %p233 = por %p231, %p232
      %p234 = scmp.ne.s32.totalorder %s226, %s228
      %p235 = scmp.eq.s32.totalorder %s29, 1
      %p236 = por %p234, %p235
      %p237 = scmp.ne.s32.totalorder %s228, %s229
      %p238 = scmp.eq.s32.totalorder %s29, 0
      %p239 = por %p237, %p238
      %p240 = scmp.ne.s32.totalorder %s228, %s229
      %p241 = scmp.eq.s32.totalorder %s30, 1
      %p242 = por %p240, %p241
      %p244 = scmp.ne.s32.totalorder %s229, %s243
      %p245 = scmp.eq.s32.totalorder %s30, 0
      %p246 = por %p244, %p245
      %s248 = sadd.s32 %s247, 1
      %p251 = scmp.eq.s32.totalorder %s24, 1
      %p252 = scmp.ne.s32.totalorder %s247, %s249
      %p253 = scmp.eq.s32.totalorder %s24, 0
      %p254 = por %p252, %p253
      %p255 = scmp.ne.s32.totalorder %s247, %s249
      %p256 = scmp.eq.s32.totalorder %s29, 1
      %p257 = por %p255, %p256
      %p258 = scmp.ne.s32.totalorder %s249, %s250
      %p259 = scmp.eq.s32.totalorder %s29, 0
      %p260 = por %p258, %p259
      %p261 = scmp.ne.s32.totalorder %s249, %s250
      %p262 = scmp.eq.s32.totalorder %s30, 1
      %p263 = por %p261, %p262
      %p265 = scmp.ne.s32.totalorder %s250, %s264
      %p266 = scmp.eq.s32.totalorder %s30, 0
      %p267 = por %p265, %p266
      %s269 = sadd.s32 %s268, 1
      %p272 = scmp.eq.s32.totalorder %s24, 1
      %p273 = scmp.ne.s32.totalorder %s268, %s270
      %p274 = scmp.eq.s32.totalorder %s24, 0
      %p275 = por %p273, %p274
      %p276 = scmp.ne.s32.totalorder %s268, %s270
      %p277 = scmp.eq.s32.totalorder %s29, 1
      %p278 = por %p276, %p277
      %p279 = scmp.ne.s32.totalorder %s270, %s271
      %p280 = scmp.eq.s32.totalorder %s29, 0
      %p281 = por %p279, %p280
      %p282 = scmp.ne.s32.totalorder %s270, %s271
      %p283 = scmp.eq.s32.totalorder %s30, 1
      %p284 = por %p282, %p283
      %p286 = scmp.ne.s32.totalorder %s271, %s285
      %p287 = scmp.eq.s32.totalorder %s30, 0
      %p288 = por %p286, %p287
      %s290 = sadd.s32 %s289, 1
      %p293 = scmp.eq.s32.totalorder %s24, 1
      %p294 = scmp.ne.s32.totalorder %s289, %s291
      %p295 = scmp.eq.s32.totalorder %s24, 0
      %p296 = por %p294, %p295
      %p297 = scmp.ne.s32.totalorder %s289, %s291
      %p298 = scmp.eq.s32.totalorder %s29, 1
      %p299 = por %p297, %p298
      %p300 = scmp.ne.s32.totalorder %s291, %s292
      %p301 = scmp.eq.s32.totalorder %s29, 0
      %p302 = por %p300, %p301
      %p303 = scmp.ne.s32.totalorder %s291, %s292
      %p304 = scmp.eq.s32.totalorder %s30, 1
      %p305 = por %p303, %p304
      %p307 = scmp.ne.s32.totalorder %s292, %s306
      %p308 = scmp.eq.s32.totalorder %s30, 0
      %p309 = por %p307, %p308
      %s310 = ssub.s32 %s24, %s31
      %p311 = scmp.eq.s32.totalorder %s310, 0
      %s313 = sadd.s32 %s312, 1
      %s314 = scalar_select %p311, %s312, %s313
      %p317 = pneg %p311
      %p318 = scmp.eq.s32.totalorder %s24, 1
      %p319 = por %p317, %p318
      %p320 = scmp.ne.s32.totalorder %s312, %s315
      %p321 = scmp.eq.s32.totalorder %s24, 0
      %p322 = por %p320, %p321
      %p323 = scmp.ne.s32.totalorder %s312, %s315
      %p324 = scmp.eq.s32.totalorder %s29, 1
      %p325 = por %p323, %p324
      %p326 = scmp.ne.s32.totalorder %s315, %s316
      %p327 = scmp.eq.s32.totalorder %s29, 0
      %p328 = por %p326, %p327
      %p329 = scmp.ne.s32.totalorder %s315, %s316
      %p330 = scmp.eq.s32.totalorder %s30, 1
      %p331 = por %p329, %p330
      %p333 = scmp.ne.s32.totalorder %s316, %s332
      %p334 = scmp.eq.s32.totalorder %s30, 0
      %p335 = por %p333, %p334
      %p336 = scmp.le.s32.totalorder 1, %s24
      %p337 = scmp.lt.s32.totalorder %s24, 3
      %p338 = pnand %p336, %p337
      %p339 = pneg %p338
      // Predicated region
      $region9: #{tpu_custom_call.1} parent=5 // pred_check
        _
      $region10: #{tpu_custom_call.1} parent=5 // pred_check_branch
        %341 = sbr.rel (%p338) target = $region12
      $region11: #{tpu_custom_call.1} parent=5 // pred_region
        %s342 = ssub.s32 %s24, 1
        // Predicated region
        $region13: #{tpu_custom_call.1} parent=11 // pred_check
          %p343 = pneg %p71
        $region14: #{tpu_custom_call.1} parent=11 // pred_check_branch
          %345 = sbr.rel (%p343) target = $region16
        $region15: #{tpu_custom_call.1} parent=11 // pred_region
          _
        $region16: #{tpu_custom_call.1} parent=11 // pred_fallthru
          _
        // Predicated region
        $region17: #{tpu_custom_call.1} parent=11 // pred_check
          %p346 = pneg %p92
        $region18: #{tpu_custom_call.1} parent=11 // pred_check_branch
          %348 = sbr.rel (%p346) target = $region20
        $region19: #{tpu_custom_call.1} parent=11 // pred_region
          _
        $region20: #{tpu_custom_call.1} parent=11 // pred_fallthru
          _
        // Predicated region
        $region21: #{tpu_custom_call.1} parent=11 // pred_check
          %p349 = pneg %p113
        $region22: #{tpu_custom_call.1} parent=11 // pred_check_branch
          %351 = sbr.rel (%p349) target = $region24
        $region23: #{tpu_custom_call.1} parent=11 // pred_region
          _
        $region24: #{tpu_custom_call.1} parent=11 // pred_fallthru
          _
        // Predicated region
        $region25: #{tpu_custom_call.1} parent=11 // pred_check
          %p352 = pneg %p134
        $region26: #{tpu_custom_call.1} parent=11 // pred_check_branch
          %354 = sbr.rel (%p352) target = $region28
        $region27: #{tpu_custom_call.1} parent=11 // pred_region
          _
        $region28: #{tpu_custom_call.1} parent=11 // pred_fallthru
          _
        // Predicated region
        $region29: #{tpu_custom_call.1} parent=11 // pred_check
          %p355 = pneg %p155
        $region30: #{tpu_custom_call.1} parent=11 // pred_check_branch
          %357 = sbr.rel (%p355) target = $region32
        $region31: #{tpu_custom_call.1} parent=11 // pred_region
          %s359 = ssub.s32 3072, 3072
          %360 = vsyncadd [#allocation3], %s359
          %s361 = sshll.u32 [#allocation2], 4
          %s362 = int_to_ptr.vmem [resolvable:$true] %s361
          %367 = dma.hbm_to_vmem [thread:$0]  %s5, 3072, %s362, [#allocation3], 128, 128, 8
        $region32: #{tpu_custom_call.1} parent=11 // pred_fallthru
          _
        // Predicated region
        $region33: #{tpu_custom_call.1} parent=11 // pred_check
          %p368 = pneg %p176
        $region34: #{tpu_custom_call.1} parent=11 // pred_check_branch
          %370 = sbr.rel (%p368) target = $region36
        $region35: #{tpu_custom_call.1} parent=11 // pred_region
          _
        $region36: #{tpu_custom_call.1} parent=11 // pred_fallthru
          _
        // Predicated region
        $region37: #{tpu_custom_call.1} parent=11 // pred_check
          %p371 = pneg %p197
        $region38: #{tpu_custom_call.1} parent=11 // pred_check_branch
          %373 = sbr.rel (%p371) target = $region40
        $region39: #{tpu_custom_call.1} parent=11 // pred_region
          %s375 = ssub.s32 12288, 12288
          %376 = vsyncadd [#allocation6], %s375
          %s377 = sshll.u32 [#allocation5], 4
          %s378 = int_to_ptr.vmem [resolvable:$true] %s377
          %383 = dma.hbm_to_vmem [thread:$0]  %s7, 12288, %s378, [#allocation6], 256, 256, 16
        $region40: #{tpu_custom_call.1} parent=11 // pred_fallthru
          _
        // Predicated region
        $region41: #{tpu_custom_call.1} parent=11 // pred_check
          %p384 = pneg %p218
        $region42: #{tpu_custom_call.1} parent=11 // pred_check_branch
          %386 = sbr.rel (%p384) target = $region44
        $region43: #{tpu_custom_call.1} parent=11 // pred_region
          _
        $region44: #{tpu_custom_call.1} parent=11 // pred_fallthru
          _
        // Predicated region
        $region45: #{tpu_custom_call.1} parent=11 // pred_check
          %p387 = pneg %p239
        $region46: #{tpu_custom_call.1} parent=11 // pred_check_branch
          %389 = sbr.rel (%p387) target = $region48
        $region47: #{tpu_custom_call.1} parent=11 // pred_region
          _
        $region48: #{tpu_custom_call.1} parent=11 // pred_fallthru
          _
        // Predicated region
        $region49: #{tpu_custom_call.1} parent=11 // pred_check
          %p390 = pneg %p260
        $region50: #{tpu_custom_call.1} parent=11 // pred_check_branch
          %392 = sbr.rel (%p390) target = $region52
        $region51: #{tpu_custom_call.1} parent=11 // pred_region
          _
        $region52: #{tpu_custom_call.1} parent=11 // pred_fallthru
          _
        // Predicated region
        $region53: #{tpu_custom_call.1} parent=11 // pred_check
          %p393 = pneg %p281
        $region54: #{tpu_custom_call.1} parent=11 // pred_check_branch
          %395 = sbr.rel (%p393) target = $region56
        $region55: #{tpu_custom_call.1} parent=11 // pred_region
          _
        $region56: #{tpu_custom_call.1} parent=11 // pred_fallthru
          _
        // Predicated region
        $region57: #{tpu_custom_call.1} parent=11 // pred_check
          %p396 = pneg %p302
        $region58: #{tpu_custom_call.1} parent=11 // pred_check_branch
          %398 = sbr.rel (%p396) target = $region60
        $region59: #{tpu_custom_call.1} parent=11 // pred_region
          _
        $region60: #{tpu_custom_call.1} parent=11 // pred_fallthru
          _
      $region12: #{tpu_custom_call.1} parent=5 // pred_fallthru
        _
      %p399 = scmp.lt.s32.totalorder %s24, 2
      // Predicated region
      $region61: #{tpu_custom_call.1} parent=5 // pred_check
        %p400 = pneg %p399
      $region62: #{tpu_custom_call.1} parent=5 // pred_check_branch
        %402 = sbr.rel (%p400) target = $region64
      $region63: #{tpu_custom_call.1} parent=5 // pred_region
        // Predicated region
        $region65: #{tpu_custom_call.1} parent=63 // pred_check
          %p403 = pneg %p44
        $region66: #{tpu_custom_call.1} parent=63 // pred_check_branch
          %405 = sbr.rel (%p403) target = $region68
        $region67: #{tpu_custom_call.1} parent=63 // pred_region
          %s406 = smul.u32 32, %s24
          %p407 = scmp.lt.s32.totalorder %s406, 63
          %s408 = scalar_select %p407, %s406, 63
          %s409 = smul.addr %s408, 8
          %s410 = scalar_lea.vmem %s0, %s409
          %s411 = smul.u32 32, %s24
        $region68: #{tpu_custom_call.1} parent=63 // pred_fallthru
          _
      $region64: #{tpu_custom_call.1} parent=5 // pred_fallthru
        _
      %p412 = scmp.le.s32.totalorder 1, %s24
      %p413 = scmp.lt.s32.totalorder %s24, 3
      %p414 = pnand %p412, %p413
      %p415 = pneg %p414
      // Predicated region
      $region69: #{tpu_custom_call.1} parent=5 // pred_check
        _
      $region70: #{tpu_custom_call.1} parent=5 // pred_check_branch
        %417 = sbr.rel (%p414) target = $region72
      $region71: #{tpu_custom_call.1} parent=5 // pred_region
        %s418 = ssub.s32 %s24, 1
        // Predicated region
        $region73: #{tpu_custom_call.1} parent=71 // pred_check
          %p419 = pneg %p155
        $region74: #{tpu_custom_call.1} parent=71 // pred_check_branch
          %421 = sbr.rel (%p419) target = $region76
        $region75: #{tpu_custom_call.1} parent=71 // pred_region
          %422 = dma.done [#allocation3], 3072
        $region76: #{tpu_custom_call.1} parent=71 // pred_fallthru
          _
        // Predicated region
        $region77: #{tpu_custom_call.1} parent=71 // pred_check
          %p423 = pneg %p197
        $region78: #{tpu_custom_call.1} parent=71 // pred_check_branch
          %425 = sbr.rel (%p423) target = $region80
        $region79: #{tpu_custom_call.1} parent=71 // pred_region
          %426 = dma.done [#allocation6], 12288
        $region80: #{tpu_custom_call.1} parent=71 // pred_fallthru
          _
        %s427 = smul.u32 32, %s29
        %p428 = scmp.lt.s32.totalorder %s427, 63
        %s429 = scalar_select %p428, %s427, 63
        %s430 = smul.addr %s429, 8
        %s431 = scalar_lea.vmem %s0, %s430
        %p432 = pneg %p50
        %p433 = pneg %p47
        %p434 = pneg %p71
        %p435 = pneg %p68
        %p436 = pneg %p92
        %p437 = pneg %p89
        %p438 = pneg %p113
        %p439 = pneg %p110
        %p440 = pneg %p134
        %p441 = pneg %p131
        %p442 = pneg %p155
        %p443 = pneg %p152
        %p444 = pneg %p176
        %p445 = pneg %p173
        %p446 = pneg %p197
        %p447 = pneg %p194
        %p448 = pneg %p218
        %p449 = pneg %p215
        %p450 = pneg %p239
        %p451 = pneg %p236
        %p452 = pneg %p260
        %p453 = pneg %p257
        %p454 = pneg %p281
        %p455 = pneg %p278
        %p456 = pneg %p302
        %p457 = pneg %p299
        %p458 = pneg %p328
        %p459 = pneg %p325
        %s460 = sand.u32 %s315, 1
        %s461 = scalar_lea.sflag [#allocation4], %s460
        %s462 = sand.u32 %s315, 1
        %s463 = smul.addr %s462, 32
        %s464 = scalar_lea.vmem [#allocation7], %s463
        %s465 = smul.u32 32, %s29
        %p466 = scmp.lt.s32.totalorder %s465, 63
        %s467 = scalar_select %p466, %s465, 63
        %s468 = smul.addr %s467, 8
        %s469 = scalar_lea.vmem %s0, %s468
        %s470 = smul.u32 32, %s29
        %s471 = smul.u32 4, %s29
        %v472 = vld [vmem:[%s469] sm:$0xff]
        %v473 = vld [vmem:[%s469 + $0x8] sm:$0xff]
        %v474 = vld [vmem:[%s469 + $0x10] sm:$0xff]
        %v475 = vld [vmem:[%s469 + $0x18] sm:$0xff]
        %v476 = vld [vmem:[%s469 + $0x20] sm:$0xff]
        %v477 = vld [vmem:[%s469 + $0x28] sm:$0xff]
        %v478 = vld [vmem:[%s469 + $0x30] sm:$0xff]
        %v479 = vld [vmem:[%s469 + $0x38] sm:$0xff]
        %v480 = vld [vmem:[%s469 + $0x40] sm:$0xff]
        %v481 = vld [vmem:[%s469 + $0x48] sm:$0xff]
        %v482 = vld [vmem:[%s469 + $0x50] sm:$0xff]
        %v483 = vld [vmem:[%s469 + $0x58] sm:$0xff]
        %v484 = vld [vmem:[%s469 + $0x60] sm:$0xff]
        %v485 = vld [vmem:[%s469 + $0x68] sm:$0xff]
        %v486 = vld [vmem:[%s469 + $0x70] sm:$0xff]
        %v487 = vld [vmem:[%s469 + $0x78] sm:$0xff]
        %v488 = vld [vmem:[%s469 + $0x80] sm:$0xff]
        %v489 = vld [vmem:[%s469 + $0x88] sm:$0xff]
        %v490 = vld [vmem:[%s469 + $0x90] sm:$0xff]
        %v491 = vld [vmem:[%s469 + $0x98] sm:$0xff]
        %v492 = vld [vmem:[%s469 + $0xa0] sm:$0xff]
        %v493 = vld [vmem:[%s469 + $0xa8] sm:$0xff]
        %v494 = vld [vmem:[%s469 + $0xb0] sm:$0xff]
        %v495 = vld [vmem:[%s469 + $0xb8] sm:$0xff]
        %v496 = vld [vmem:[%s469 + $0xc0] sm:$0xff]
        %v497 = vld [vmem:[%s469 + $0xc8] sm:$0xff]
        %v498 = vld [vmem:[%s469 + $0xd0] sm:$0xff]
        %v499 = vld [vmem:[%s469 + $0xd8] sm:$0xff]
        %v500 = vld [vmem:[%s469 + $0xe0] sm:$0xff]
        %v501 = vld [vmem:[%s469 + $0xe8] sm:$0xff]
        %v502 = vld [vmem:[%s469 + $0xf0] sm:$0xff]
        %v503 = vld [vmem:[%s469 + $0xf8] sm:$0xff]
        %v504 = vld [vmem:[%s1] sm:$0x1]
        %506 = vset.pattern.permute.xlu0 0
        %507 = vperm.xlu0 %506, 0.0
        %v508 = vpop.permute.xlu0 %507
        %511 = vset.pattern.permute.xlu0 0
        %512 = vperm.xlu0 %511, %v472
        %v513 = vpop.permute.xlu0 %512
        %516 = vset.pattern.permute.xlu0 0
        %517 = vperm.xlu0 %516, %v473
        %v518 = vpop.permute.xlu0 %517
        %521 = vset.pattern.permute.xlu0 0
        %522 = vperm.xlu0 %521, %v474
        %v523 = vpop.permute.xlu0 %522
        %526 = vset.pattern.permute.xlu0 0
        %527 = vperm.xlu0 %526, %v475
        %v528 = vpop.permute.xlu0 %527
        %531 = vset.pattern.permute.xlu0 0
        %532 = vperm.xlu0 %531, %v476
        %v533 = vpop.permute.xlu0 %532
        %536 = vset.pattern.permute.xlu0 0
        %537 = vperm.xlu0 %536, %v477
        %v538 = vpop.permute.xlu0 %537
        %541 = vset.pattern.permute.xlu0 0
        %542 = vperm.xlu0 %541, %v478
        %v543 = vpop.permute.xlu0 %542
        %546 = vset.pattern.permute.xlu0 0
        %547 = vperm.xlu0 %546, %v479
        %v548 = vpop.permute.xlu0 %547
        %551 = vset.pattern.permute.xlu0 0
        %552 = vperm.xlu0 %551, %v480
        %v553 = vpop.permute.xlu0 %552
        %556 = vset.pattern.permute.xlu0 0
        %557 = vperm.xlu0 %556, %v481
        %v558 = vpop.permute.xlu0 %557
        %561 = vset.pattern.permute.xlu0 0
        %562 = vperm.xlu0 %561, %v482
        %v563 = vpop.permute.xlu0 %562
        %566 = vset.pattern.permute.xlu0 0
        %567 = vperm.xlu0 %566, %v483
        %v568 = vpop.permute.xlu0 %567
        %571 = vset.pattern.permute.xlu0 0
        %572 = vperm.xlu0 %571, %v484
        %v573 = vpop.permute.xlu0 %572
        %576 = vset.pattern.permute.xlu0 0
        %577 = vperm.xlu0 %576, %v485
        %v578 = vpop.permute.xlu0 %577
        %581 = vset.pattern.permute.xlu0 0
        %582 = vperm.xlu0 %581, %v486
        %v583 = vpop.permute.xlu0 %582
        %586 = vset.pattern.permute.xlu0 0
        %587 = vperm.xlu0 %586, %v487
        %v588 = vpop.permute.xlu0 %587
        %591 = vset.pattern.permute.xlu0 0
        %592 = vperm.xlu0 %591, %v488
        %v593 = vpop.permute.xlu0 %592
        %596 = vset.pattern.permute.xlu0 0
        %597 = vperm.xlu0 %596, %v489
        %v598 = vpop.permute.xlu0 %597
        %601 = vset.pattern.permute.xlu0 0
        %602 = vperm.xlu0 %601, %v490
        %v603 = vpop.permute.xlu0 %602
        %606 = vset.pattern.permute.xlu0 0
        %607 = vperm.xlu0 %606, %v491
        %v608 = vpop.permute.xlu0 %607
        %611 = vset.pattern.permute.xlu0 0
        %612 = vperm.xlu0 %611, %v492
        %v613 = vpop.permute.xlu0 %612
        %616 = vset.pattern.permute.xlu0 0
        %617 = vperm.xlu0 %616, %v493
        %v618 = vpop.permute.xlu0 %617
        %621 = vset.pattern.permute.xlu0 0
        %622 = vperm.xlu0 %621, %v494
        %v623 = vpop.permute.xlu0 %622
        %626 = vset.pattern.permute.xlu0 0
        %627 = vperm.xlu0 %626, %v495
        %v628 = vpop.permute.xlu0 %627
        %631 = vset.pattern.permute.xlu0 0
        %632 = vperm.xlu0 %631, %v496
        %v633 = vpop.permute.xlu0 %632
        %636 = vset.pattern.permute.xlu0 0
        %637 = vperm.xlu0 %636, %v497
        %v638 = vpop.permute.xlu0 %637
        %641 = vset.pattern.permute.xlu0 0
        %642 = vperm.xlu0 %641, %v498
        %v643 = vpop.permute.xlu0 %642
        %646 = vset.pattern.permute.xlu0 0
        %647 = vperm.xlu0 %646, %v499
        %v648 = vpop.permute.xlu0 %647
        %v650 = vlaneseq
        %v651 = vshrl.u32 %v650, 7
        %v652 = vsub.s32 0, %v651
        %v653 = vrot.slane %v504, %v652
        %v654 = vmul.f32 %v508, %v653
        %v655 = vmul.f32 %v513, %v653
        %v656 = vmul.f32 %v518, %v653
        %v657 = vmul.f32 %v523, %v653
        %v658 = vmul.f32 %v528, %v653
        %v659 = vmul.f32 %v533, %v653
        %v660 = vmul.f32 %v538, %v653
        %v661 = vmul.f32 %v543, %v653
        %v662 = vmul.f32 %v548, %v653
        %v663 = vmul.f32 %v553, %v653
        %v664 = vmul.f32 %v558, %v653
        %v665 = vmul.f32 %v563, %v653
        %v666 = vmul.f32 %v568, %v653
        %v667 = vmul.f32 %v573, %v653
        %v668 = vmul.f32 %v578, %v653
        %v669 = vmul.f32 %v583, %v653
        %v670 = vmul.f32 %v588, %v653
        %v671 = vmul.f32 %v593, %v653
        %v672 = vmul.f32 %v598, %v653
        %v673 = vmul.f32 %v603, %v653
        %v674 = vmul.f32 %v608, %v653
        %v675 = vmul.f32 %v613, %v653
        %v676 = vmul.f32 %v618, %v653
        %v677 = vmul.f32 %v623, %v653
        %v678 = vmul.f32 %v628, %v653
        %v679 = vmul.f32 %v633, %v653
        %v680 = vmul.f32 %v638, %v653
        %v681 = vmul.f32 %v643, %v653
        %v682 = vmul.f32 %v648, %v653
        %v683 = vld [vmem:[%s1 + $0x1] sm:$0x1]
        %685 = vset.pattern.permute.xlu0 0
        %686 = vperm.xlu0 %685, %v500
        %v687 = vpop.permute.xlu0 %686
        %690 = vset.pattern.permute.xlu0 0
        %691 = vperm.xlu0 %690, %v501
        %v692 = vpop.permute.xlu0 %691
        %695 = vset.pattern.permute.xlu0 0
        %696 = vperm.xlu0 %695, %v502
        %v697 = vpop.permute.xlu0 %696
        %700 = vset.pattern.permute.xlu0 0
        %701 = vperm.xlu0 %700, %v503
        %v702 = vpop.permute.xlu0 %701
        %v704 = vlaneseq
        %v705 = vshrl.u32 %v704, 7
        %v706 = vsub.s32 0, %v705
        %v707 = vrot.slane %v683, %v706
        %v708 = vmul.f32 %v513, %v707
        %v709 = vmul.f32 %v518, %v707
        %v710 = vmul.f32 %v523, %v707
        %v711 = vmul.f32 %v528, %v707
        %v712 = vmul.f32 %v533, %v707
        %v713 = vmul.f32 %v538, %v707
        %v714 = vmul.f32 %v543, %v707
        %v715 = vmul.f32 %v548, %v707
        %v716 = vmul.f32 %v553, %v707
        %v717 = vmul.f32 %v558, %v707
        %v718 = vmul.f32 %v563, %v707
        %v719 = vmul.f32 %v568, %v707
        %v720 = vmul.f32 %v573, %v707
        %v721 = vmul.f32 %v578, %v707
        %v722 = vmul.f32 %v583, %v707
        %v723 = vmul.f32 %v588, %v707
        %v724 = vmul.f32 %v593, %v707
        %v725 = vmul.f32 %v598, %v707
        %v726 = vmul.f32 %v603, %v707
        %v727 = vmul.f32 %v608, %v707
        %v728 = vmul.f32 %v613, %v707
        %v729 = vmul.f32 %v618, %v707
        %v730 = vmul.f32 %v623, %v707
        %v731 = vmul.f32 %v628, %v707
        %v732 = vmul.f32 %v633, %v707
        %v733 = vmul.f32 %v638, %v707
        %v734 = vmul.f32 %v643, %v707
        %v735 = vmul.f32 %v648, %v707
        %v736 = vmul.f32 %v687, %v707
        %v737 = vmul.f32 %v692, %v707
        %v738 = vmul.f32 %v697, %v707
        %v739 = vmul.f32 %v702, %v707
        %v740 = vadd.f32 %v654, %v708
        %v741 = vadd.f32 %v654, %v709
        %v742 = vadd.f32 %v654, %v710
        %v743 = vadd.f32 %v654, %v711
        %v744 = vadd.f32 %v655, %v712
        %v745 = vadd.f32 %v656, %v713
        %v746 = vadd.f32 %v657, %v714
        %v747 = vadd.f32 %v658, %v715
        %v748 = vadd.f32 %v659, %v716
        %v749 = vadd.f32 %v660, %v717
        %v750 = vadd.f32 %v661, %v718
        %v751 = vadd.f32 %v662, %v719
        %v752 = vadd.f32 %v663, %v720
        %v753 = vadd.f32 %v664, %v721
        %v754 = vadd.f32 %v665, %v722
        %v755 = vadd.f32 %v666, %v723
        %v756 = vadd.f32 %v667, %v724
        %v757 = vadd.f32 %v668, %v725
        %v758 = vadd.f32 %v669, %v726
        %v759 = vadd.f32 %v670, %v727
        %v760 = vadd.f32 %v671, %v728
        %v761 = vadd.f32 %v672, %v729
        %v762 = vadd.f32 %v673, %v730
        %v763 = vadd.f32 %v674, %v731
        %v764 = vadd.f32 %v675, %v732
        %v765 = vadd.f32 %v676, %v733
        %v766 = vadd.f32 %v677, %v734
        %v767 = vadd.f32 %v678, %v735
        %v768 = vadd.f32 %v679, %v736
        %v769 = vadd.f32 %v680, %v737
        %v770 = vadd.f32 %v681, %v738
        %v771 = vadd.f32 %v682, %v739
        %v772 = vld [vmem:[%s1 + $0x2] sm:$0x1]
        %v773 = vlaneseq
        %v774 = vshrl.u32 %v773, 7
        %v775 = vsub.s32 0, %v774
        %v776 = vrot.slane %v772, %v775
        %v777 = vmul.f32 %v533, %v776
        %v778 = vmul.f32 %v538, %v776
        %v779 = vmul.f32 %v543, %v776
        %v780 = vmul.f32 %v548, %v776
        %v781 = vmul.f32 %v553, %v776
        %v782 = vmul.f32 %v558, %v776
        %v783 = vmul.f32 %v563, %v776
        %v784 = vmul.f32 %v568, %v776
        %v785 = vmul.f32 %v573, %v776
        %v786 = vmul.f32 %v578, %v776
        %v787 = vmul.f32 %v583, %v776
        %v788 = vmul.f32 %v588, %v776
        %v789 = vmul.f32 %v593, %v776
        %v790 = vmul.f32 %v598, %v776
        %v791 = vmul.f32 %v603, %v776
        %v792 = vmul.f32 %v608, %v776
        %v793 = vmul.f32 %v613, %v776
        %v794 = vmul.f32 %v618, %v776
        %v795 = vmul.f32 %v623, %v776
        %v796 = vmul.f32 %v628, %v776
        %v797 = vmul.f32 %v633, %v776
        %v798 = vmul.f32 %v638, %v776
        %v799 = vmul.f32 %v643, %v776
        %v800 = vmul.f32 %v648, %v776
        %v801 = vmul.f32 %v687, %v776
        %v802 = vmul.f32 %v692, %v776
        %v803 = vmul.f32 %v697, %v776
        %v804 = vmul.f32 %v702, %v776
        %v805 = vmul.f32 %v508, %v776
        %v806 = vadd.f32 %v740, %v777
        %v807 = vadd.f32 %v741, %v778
        %v808 = vadd.f32 %v742, %v779
        %v809 = vadd.f32 %v743, %v780
        %v810 = vadd.f32 %v744, %v781
        %v811 = vadd.f32 %v745, %v782
        %v812 = vadd.f32 %v746, %v783
        %v813 = vadd.f32 %v747, %v784
        %v814 = vadd.f32 %v748, %v785
        %v815 = vadd.f32 %v749, %v786
        %v816 = vadd.f32 %v750, %v787
        %v817 = vadd.f32 %v751, %v788
        %v818 = vadd.f32 %v752, %v789
        %v819 = vadd.f32 %v753, %v790
        %v820 = vadd.f32 %v754, %v791
        %v821 = vadd.f32 %v755, %v792
        %v822 = vadd.f32 %v756, %v793
        %v823 = vadd.f32 %v757, %v794
        %v824 = vadd.f32 %v758, %v795
        %v825 = vadd.f32 %v759, %v796
        %v826 = vadd.f32 %v760, %v797
        %v827 = vadd.f32 %v761, %v798
        %v828 = vadd.f32 %v762, %v799
        %v829 = vadd.f32 %v763, %v800
        %v830 = vadd.f32 %v764, %v801
        %v831 = vadd.f32 %v765, %v802
        %v832 = vadd.f32 %v766, %v803
        %v833 = vadd.f32 %v767, %v804
        %v834 = vadd.f32 %v768, %v805
        %v835 = vadd.f32 %v769, %v805
        %v836 = vadd.f32 %v770, %v805
        %v837 = vadd.f32 %v771, %v805
        %v838 = vld [vmem:[%s2] sm:$0x1]
        %v840 = vlaneseq
        %v841 = vshrl.u32 %v840, 7
        %v842 = vsub.s32 0, %v841
        %v843 = vrot.slane %v838, %v842
        %v845 = vadd.f32 %v806, %v843
        %v846 = vadd.f32 %v807, %v843
        %v847 = vadd.f32 %v808, %v843
        %v848 = vadd.f32 %v809, %v843
        %v849 = vadd.f32 %v810, %v843
        %v850 = vadd.f32 %v811, %v843
        %v851 = vadd.f32 %v812, %v843
        %v852 = vadd.f32 %v813, %v843
        %v853 = vadd.f32 %v814, %v843
        %v854 = vadd.f32 %v815, %v843
        %v855 = vadd.f32 %v816, %v843
        %v856 = vadd.f32 %v817, %v843
        %v857 = vadd.f32 %v818, %v843
        %v858 = vadd.f32 %v819, %v843
        %v859 = vadd.f32 %v820, %v843
        %v860 = vadd.f32 %v821, %v843
        %v861 = vadd.f32 %v822, %v843
        %v862 = vadd.f32 %v823, %v843
        %v863 = vadd.f32 %v824, %v843
        %v864 = vadd.f32 %v825, %v843
        %v865 = vadd.f32 %v826, %v843
        %v866 = vadd.f32 %v827, %v843
        %v867 = vadd.f32 %v828, %v843
        %v868 = vadd.f32 %v829, %v843
        %v869 = vadd.f32 %v830, %v843
        %v870 = vadd.f32 %v831, %v843
        %v871 = vadd.f32 %v832, %v843
        %v872 = vadd.f32 %v833, %v843
        %v873 = vadd.f32 %v834, %v843
        %v874 = vadd.f32 %v835, %v843
        %v875 = vadd.f32 %v836, %v843
        %v876 = vadd.f32 %v837, %v843
        %v877 = vmax.f32 %v845, 0.0
        %v878 = vmax.f32 %v846, 0.0
        %v879 = vmax.f32 %v847, 0.0
        %v880 = vmax.f32 %v848, 0.0
        %v881 = vmax.f32 %v849, 0.0
        %v882 = vmax.f32 %v850, 0.0
        %v883 = vmax.f32 %v851, 0.0
        %v884 = vmax.f32 %v852, 0.0
        %v885 = vmax.f32 %v853, 0.0
        %v886 = vmax.f32 %v854, 0.0
        %v887 = vmax.f32 %v855, 0.0
        %v888 = vmax.f32 %v856, 0.0
        %v889 = vmax.f32 %v857, 0.0
        %v890 = vmax.f32 %v858, 0.0
        %v891 = vmax.f32 %v859, 0.0
        %v892 = vmax.f32 %v860, 0.0
        %v893 = vmax.f32 %v861, 0.0
        %v894 = vmax.f32 %v862, 0.0
        %v895 = vmax.f32 %v863, 0.0
        %v896 = vmax.f32 %v864, 0.0
        %v897 = vmax.f32 %v865, 0.0
        %v898 = vmax.f32 %v866, 0.0
        %v899 = vmax.f32 %v867, 0.0
        %v900 = vmax.f32 %v868, 0.0
        %v901 = vmax.f32 %v869, 0.0
        %v902 = vmax.f32 %v870, 0.0
        %v903 = vmax.f32 %v871, 0.0
        %v904 = vmax.f32 %v872, 0.0
        %v905 = vmax.f32 %v873, 0.0
        %v906 = vmax.f32 %v874, 0.0
        %v907 = vmax.f32 %v875, 0.0
        %v908 = vmax.f32 %v876, 0.0
        %941 = vrot.lane.b32.xlu0 %v877, 32
        %v942 = vpop.permute.xlu0 %941
        %943 = vrot.lane.b32.xlu0 %v878, 32
        %v944 = vpop.permute.xlu0 %943
        %945 = vrot.lane.b32.xlu0 %v879, 32
        %v946 = vpop.permute.xlu0 %945
        %947 = vrot.lane.b32.xlu0 %v880, 32
        %v948 = vpop.permute.xlu0 %947
        %949 = vrot.lane.b32.xlu0 %v881, 32
        %v950 = vpop.permute.xlu0 %949
        %951 = vrot.lane.b32.xlu0 %v882, 32
        %v952 = vpop.permute.xlu0 %951
        %953 = vrot.lane.b32.xlu0 %v883, 32
        %v954 = vpop.permute.xlu0 %953
        %955 = vrot.lane.b32.xlu0 %v884, 32
        %v956 = vpop.permute.xlu0 %955
        %957 = vrot.lane.b32.xlu0 %v885, 32
        %v958 = vpop.permute.xlu0 %957
        %959 = vrot.lane.b32.xlu0 %v886, 32
        %v960 = vpop.permute.xlu0 %959
        %961 = vrot.lane.b32.xlu0 %v887, 32
        %v962 = vpop.permute.xlu0 %961
        %963 = vrot.lane.b32.xlu0 %v888, 32
        %v964 = vpop.permute.xlu0 %963
        %965 = vrot.lane.b32.xlu0 %v889, 32
        %v966 = vpop.permute.xlu0 %965
        %967 = vrot.lane.b32.xlu0 %v890, 32
        %v968 = vpop.permute.xlu0 %967
        %969 = vrot.lane.b32.xlu0 %v891, 32
        %v970 = vpop.permute.xlu0 %969
        %971 = vrot.lane.b32.xlu0 %v892, 32
        %v972 = vpop.permute.xlu0 %971
        %973 = vrot.lane.b32.xlu0 %v893, 32
        %v974 = vpop.permute.xlu0 %973
        %975 = vrot.lane.b32.xlu0 %v894, 32
        %v976 = vpop.permute.xlu0 %975
        %977 = vrot.lane.b32.xlu0 %v895, 32
        %v978 = vpop.permute.xlu0 %977
        %979 = vrot.lane.b32.xlu0 %v896, 32
        %v980 = vpop.permute.xlu0 %979
        %981 = vrot.lane.b32.xlu0 %v897, 32
        %v982 = vpop.permute.xlu0 %981
        %983 = vrot.lane.b32.xlu0 %v898, 32
        %v984 = vpop.permute.xlu0 %983
        %985 = vrot.lane.b32.xlu0 %v899, 32
        %v986 = vpop.permute.xlu0 %985
        %987 = vrot.lane.b32.xlu0 %v900, 32
        %v988 = vpop.permute.xlu0 %987
        %989 = vrot.lane.b32.xlu0 %v901, 32
        %v990 = vpop.permute.xlu0 %989
        %991 = vrot.lane.b32.xlu0 %v902, 32
        %v992 = vpop.permute.xlu0 %991
        %993 = vrot.lane.b32.xlu0 %v903, 32
        %v994 = vpop.permute.xlu0 %993
        %995 = vrot.lane.b32.xlu0 %v904, 32
        %v996 = vpop.permute.xlu0 %995
        %997 = vrot.lane.b32.xlu0 %v905, 32
        %v998 = vpop.permute.xlu0 %997
        %999 = vrot.lane.b32.xlu0 %v906, 32
        %v1000 = vpop.permute.xlu0 %999
        %1001 = vrot.lane.b32.xlu0 %v907, 32
        %v1002 = vpop.permute.xlu0 %1001
        %1003 = vrot.lane.b32.xlu0 %v908, 32
        %v1004 = vpop.permute.xlu0 %1003
        %1037 = vrot.lane.b32.xlu0 %v881, 64
        %v1038 = vpop.permute.xlu0 %1037
        %1039 = vrot.lane.b32.xlu0 %v882, 64
        %v1040 = vpop.permute.xlu0 %1039
        %1041 = vrot.lane.b32.xlu0 %v883, 64
        %v1042 = vpop.permute.xlu0 %1041
        %1043 = vrot.lane.b32.xlu0 %v884, 64
        %v1044 = vpop.permute.xlu0 %1043
        %1045 = vrot.lane.b32.xlu0 %v885, 64
        %v1046 = vpop.permute.xlu0 %1045
        %1047 = vrot.lane.b32.xlu0 %v886, 64
        %v1048 = vpop.permute.xlu0 %1047
        %1049 = vrot.lane.b32.xlu0 %v887, 64
        %v1050 = vpop.permute.xlu0 %1049
        %1051 = vrot.lane.b32.xlu0 %v888, 64
        %v1052 = vpop.permute.xlu0 %1051
        %1053 = vrot.lane.b32.xlu0 %v889, 64
        %v1054 = vpop.permute.xlu0 %1053
        %1055 = vrot.lane.b32.xlu0 %v890, 64
        %v1056 = vpop.permute.xlu0 %1055
        %1057 = vrot.lane.b32.xlu0 %v891, 64
        %v1058 = vpop.permute.xlu0 %1057
        %1059 = vrot.lane.b32.xlu0 %v892, 64
        %v1060 = vpop.permute.xlu0 %1059
        %1061 = vrot.lane.b32.xlu0 %v893, 64
        %v1062 = vpop.permute.xlu0 %1061
        %1063 = vrot.lane.b32.xlu0 %v894, 64
        %v1064 = vpop.permute.xlu0 %1063
        %1065 = vrot.lane.b32.xlu0 %v895, 64
        %v1066 = vpop.permute.xlu0 %1065
        %1067 = vrot.lane.b32.xlu0 %v896, 64
        %v1068 = vpop.permute.xlu0 %1067
        %1069 = vrot.lane.b32.xlu0 %v897, 64
        %v1070 = vpop.permute.xlu0 %1069
        %1071 = vrot.lane.b32.xlu0 %v898, 64
        %v1072 = vpop.permute.xlu0 %1071
        %1073 = vrot.lane.b32.xlu0 %v899, 64
        %v1074 = vpop.permute.xlu0 %1073
        %1075 = vrot.lane.b32.xlu0 %v900, 64
        %v1076 = vpop.permute.xlu0 %1075
        %1077 = vrot.lane.b32.xlu0 %v901, 64
        %v1078 = vpop.permute.xlu0 %1077
        %1079 = vrot.lane.b32.xlu0 %v902, 64
        %v1080 = vpop.permute.xlu0 %1079
        %1081 = vrot.lane.b32.xlu0 %v903, 64
        %v1082 = vpop.permute.xlu0 %1081
        %1083 = vrot.lane.b32.xlu0 %v904, 64
        %v1084 = vpop.permute.xlu0 %1083
        %1085 = vrot.lane.b32.xlu0 %v905, 64
        %v1086 = vpop.permute.xlu0 %1085
        %1087 = vrot.lane.b32.xlu0 %v906, 64
        %v1088 = vpop.permute.xlu0 %1087
        %1089 = vrot.lane.b32.xlu0 %v907, 64
        %v1090 = vpop.permute.xlu0 %1089
        %1091 = vrot.lane.b32.xlu0 %v908, 64
        %v1092 = vpop.permute.xlu0 %1091
        %1093 = vrot.lane.b32.xlu0 0.0, 64
        %v1094 = vpop.permute.xlu0 %1093
        %vm1124 = vcmask 261120
        %v1125 = vsel %vm1124, 0.0, %v942
        %v1126 = vsel %vm1124, 0.0, %v944
        %v1127 = vsel %vm1124, 0.0, %v946
        %v1128 = vsel %vm1124, 0.0, %v948
        %v1129 = vsel %vm1124, %v877, %v950
        %v1130 = vsel %vm1124, %v878, %v952
        %v1131 = vsel %vm1124, %v879, %v954
        %v1132 = vsel %vm1124, %v880, %v956
        %v1133 = vsel %vm1124, %v881, %v958
        %v1134 = vsel %vm1124, %v882, %v960
        %v1135 = vsel %vm1124, %v883, %v962
        %v1136 = vsel %vm1124, %v884, %v964
        %v1137 = vsel %vm1124, %v885, %v966
        %v1138 = vsel %vm1124, %v886, %v968
        %v1139 = vsel %vm1124, %v887, %v970
        %v1140 = vsel %vm1124, %v888, %v972
        %v1141 = vsel %vm1124, %v889, %v974
        %v1142 = vsel %vm1124, %v890, %v976
        %v1143 = vsel %vm1124, %v891, %v978
        %v1144 = vsel %vm1124, %v892, %v980
        %v1145 = vsel %vm1124, %v893, %v982
        %v1146 = vsel %vm1124, %v894, %v984
        %v1147 = vsel %vm1124, %v895, %v986
        %v1148 = vsel %vm1124, %v896, %v988
        %v1149 = vsel %vm1124, %v897, %v990
        %v1150 = vsel %vm1124, %v898, %v992
        %v1151 = vsel %vm1124, %v899, %v994
        %v1152 = vsel %vm1124, %v900, %v996
        %v1153 = vsel %vm1124, %v901, %v998
        %v1154 = vsel %vm1124, %v902, %v1000
        %v1155 = vsel %vm1124, %v903, %v1002
        %v1156 = vsel %vm1124, %v904, %v1004
        %vm1157 = vcmask 523264
        %v1158 = vsel %vm1157, %v1125, %v1038
        %v1159 = vsel %vm1157, %v1126, %v1040
        %v1160 = vsel %vm1157, %v1127, %v1042
        %v1161 = vsel %vm1157, %v1128, %v1044
        %v1162 = vsel %vm1157, %v1129, %v1046
        %v1163 = vsel %vm1157, %v1130, %v1048
        %v1164 = vsel %vm1157, %v1131, %v1050
        %v1165 = vsel %vm1157, %v1132, %v1052
        %v1166 = vsel %vm1157, %v1133, %v1054
        %v1167 = vsel %vm1157, %v1134, %v1056
        %v1168 = vsel %vm1157, %v1135, %v1058
        %v1169 = vsel %vm1157, %v1136, %v1060
        %v1170 = vsel %vm1157, %v1137, %v1062
        %v1171 = vsel %vm1157, %v1138, %v1064
        %v1172 = vsel %vm1157, %v1139, %v1066
        %v1173 = vsel %vm1157, %v1140, %v1068
        %v1174 = vsel %vm1157, %v1141, %v1070
        %v1175 = vsel %vm1157, %v1142, %v1072
        %v1176 = vsel %vm1157, %v1143, %v1074
        %v1177 = vsel %vm1157, %v1144, %v1076
        %v1178 = vsel %vm1157, %v1145, %v1078
        %v1179 = vsel %vm1157, %v1146, %v1080
        %v1180 = vsel %vm1157, %v1147, %v1082
        %v1181 = vsel %vm1157, %v1148, %v1084
        %v1182 = vsel %vm1157, %v1149, %v1086
        %v1183 = vsel %vm1157, %v1150, %v1088
        %v1184 = vsel %vm1157, %v1151, %v1090
        %v1185 = vsel %vm1157, %v1152, %v1092
        %v1186 = vsel %vm1157, %v1153, %v1094
        %v1187 = vsel %vm1157, %v1154, %v1094
        %v1188 = vsel %vm1157, %v1155, %v1094
        %v1189 = vsel %vm1157, %v1156, %v1094
        %v1190 = vld [vmem:[%s3] sm:$0xff]
        %v1191 = vld [vmem:[%s3 + $0x8] sm:$0xff]
        %v1192 = vld [vmem:[%s3 + $0x10] sm:$0xff]
        %v1193 = vld [vmem:[%s3 + $0x18] sm:$0xff]
        %v1194 = vld [vmem:[%s3 + $0x20] sm:$0xff]
        %v1195 = vld [vmem:[%s3 + $0x28] sm:$0xff]
        %v1196 = vld [vmem:[%s3 + $0x30] sm:$0xff]
        %v1197 = vld [vmem:[%s3 + $0x38] sm:$0xff]
        %v1198 = vld [vmem:[%s3 + $0x40] sm:$0xff]
        %v1199 = vld [vmem:[%s3 + $0x48] sm:$0xff]
        %v1200 = vld [vmem:[%s3 + $0x50] sm:$0xff]
        %v1201 = vld [vmem:[%s3 + $0x58] sm:$0xff]
        %v1202 = vld [vmem:[%s4] sm:$0x1]
        %v1204 = vlaneseq
        %v1205 = vshrl.u32 %v1204, 7
        %v1206 = vsub.s32 0, %v1205
        %v1207 = vrot.slane %v1202, %v1206
        %vm1209 = vcmask 785408
        %v1211 = vsel %vm1209, %v1158, 0
        %v1214 = vsel %vm1209, %v1159, 0
        %v1217 = vsel %vm1209, %v1160, 0
        %v1220 = vsel %vm1209, %v1161, 0
        %v1223 = vsel %vm1209, %v1162, 0
        %v1226 = vsel %vm1209, %v1163, 0
        %v1229 = vsel %vm1209, %v1164, 0
        %v1232 = vsel %vm1209, %v1165, 0
        %v1235 = vsel %vm1209, %v1166, 0
        %v1238 = vsel %vm1209, %v1167, 0
        %v1241 = vsel %vm1209, %v1168, 0
        %v1244 = vsel %vm1209, %v1169, 0
        %v1247 = vsel %vm1209, %v1170, 0
        %v1250 = vsel %vm1209, %v1171, 0
        %v1253 = vsel %vm1209, %v1172, 0
        %v1256 = vsel %vm1209, %v1173, 0
        %v1259 = vsel %vm1209, %v1174, 0
        %v1262 = vsel %vm1209, %v1175, 0
        %v1265 = vsel %vm1209, %v1176, 0
        %v1268 = vsel %vm1209, %v1177, 0
        %v1271 = vsel %vm1209, %v1178, 0
        %v1274 = vsel %vm1209, %v1179, 0
        %v1277 = vsel %vm1209, %v1180, 0
        %v1280 = vsel %vm1209, %v1181, 0
        %v1283 = vsel %vm1209, %v1182, 0
        %v1286 = vsel %vm1209, %v1183, 0
        %v1289 = vsel %vm1209, %v1184, 0
        %v1292 = vsel %vm1209, %v1185, 0
        %v1295 = vsel %vm1209, %v1186, 0
        %v1298 = vsel %vm1209, %v1187, 0
        %v1301 = vsel %vm1209, %v1188, 0
        %v1304 = vsel %vm1209, %v1189, 0
        %1306 = vmatprep.subr.mxu0 0.0
        %1307 = vmatpush1.msra.mxu0 0.0
        %1308 = vmatprep.subr.mxu0 0.0
        %1309 = vmatpush1.msra.mxu0 0.0
        %1310 = vmatprep.subr.mxu0 0.0
        %1311 = vmatpush1.msra.mxu0 0.0
        %1312 = vmatprep.subr.mxu0 0.0
        %1313 = vmatpush1.msra.mxu0 0.0
        %1314 = vmatprep.subr.mxu0 0.0
        %1315 = vmatpush1.msra.mxu0 %v1201
        %1316 = vmatprep.subr.mxu0 0.0
        %1317 = vmatpush1.msra.mxu0 %v1200
        %1318 = vmatprep.subr.mxu0 0.0
        %1319 = vmatpush1.msra.mxu0 %v1199
        %1320 = vmatprep.subr.mxu0 0.0
        %1321 = vmatpush1.msra.mxu0 %v1198
        %1322 = vmatprep.subr.mxu0 0.0
        %1323 = vmatpush1.msra.mxu0 %v1197
        %1324 = vmatprep.subr.mxu0 0.0
        %1325 = vmatpush1.msra.mxu0 %v1196
        %1326 = vmatprep.subr.mxu0 0.0
        %1327 = vmatpush1.msra.mxu0 %v1195
        %1328 = vmatprep.subr.mxu0 0.0
        %1329 = vmatpush1.msra.mxu0 %v1194
        %1330 = vmatprep.subr.mxu0 0.0
        %1331 = vmatpush1.msra.mxu0 %v1193
        %1332 = vmatprep.subr.mxu0 0.0
        %1333 = vmatpush1.msra.mxu0 %v1192
        %1334 = vmatprep.subr.mxu0 0.0
        %1335 = vmatpush1.msra.mxu0 %v1191
        %1336 = vmatprep.subr.mxu0 0.0
        %1337 = vmatpush1.msra.mxu0 %v1190
        %1338 = vmatprep.subr.mxu0 0.0
        %1339 = vmatpush2.msra.mxu0 0.0
        %1340 = vmatprep.subr.mxu0 0.0
        %1341 = vmatpush2.msra.mxu0 0.0
        %1342 = vmatprep.subr.mxu0 0.0
        %1343 = vmatpush2.msra.mxu0 0.0
        %1344 = vmatprep.subr.mxu0 0.0
        %1345 = vmatpush2.msra.mxu0 0.0
        %1346 = vmatprep.subr.mxu0 0.0
        %1347 = vmatpush2.msra.mxu0 0.0
        %1348 = vmatprep.subr.mxu0 0.0
        %1349 = vmatpush2.msra.mxu0 0.0
        %1350 = vmatprep.subr.mxu0 0.0
        %1351 = vmatpush2.msra.mxu0 0.0
        %1352 = vmatprep.subr.mxu0 0.0
        %1353 = vmatpush2.msra.mxu0 0.0
        %1354 = vmatprep.subr.mxu0 0.0
        %1355 = vmatpush2.msra.mxu0 0.0
        %1356 = vmatprep.subr.mxu0 0.0
        %1357 = vmatpush2.msra.mxu0 0.0
        %1358 = vmatprep.subr.mxu0 0.0
        %1359 = vmatpush2.msra.mxu0 0.0
        %1360 = vmatprep.subr.mxu0 0.0
        %1361 = vmatpush2.msra.mxu0 0.0
        %1362 = vmatprep.subr.mxu0 0.0
        %1363 = vmatpush2.msra.mxu0 0.0
        %1364 = vmatprep.subr.mxu0 0.0
        %1365 = vmatpush2.msra.mxu0 0.0
        %1366 = vmatprep.subr.mxu0 0.0
        %1367 = vmatpush2.msra.mxu0 0.0
        %1368 = vmatprep.subr.mxu0 0.0
        %1369 = vmatpush2.msra.mxu0 0.0
        %1370 = vmatprep.mubr.f32.mxu0 0.0
        %1371 = vmatmul.mubr.f32.gmra.mxu0 %v1211
        %v1372 = vpop.f32.mrf.mxu0
        %v1373 = vadd.f32 %v1207, %v1372
        %v1374 = vpop.f32.mrf.mxu0
        %1375 = vmatprep.mubr.f32.mxu0 0.0
        %1376 = vmatmul.mubr.f32.gmra.mxu0 %v1214
        %v1377 = vpop.f32.mrf.mxu0
        %v1378 = vadd.f32 %v1207, %v1377
        %v1379 = vpop.f32.mrf.mxu0
        %1380 = vmatprep.mubr.f32.mxu0 0.0
        %1381 = vmatmul.mubr.f32.gmra.mxu0 %v1217
        %v1382 = vpop.f32.mrf.mxu0
        %v1383 = vadd.f32 %v1207, %v1382
        %v1384 = vpop.f32.mrf.mxu0
        %1385 = vmatprep.mubr.f32.mxu0 0.0
        %1386 = vmatmul.mubr.f32.gmra.mxu0 %v1220
        %v1387 = vpop.f32.mrf.mxu0
        %v1388 = vadd.f32 %v1207, %v1387
        %v1389 = vpop.f32.mrf.mxu0
        %1390 = vmatprep.mubr.f32.mxu0 0.0
        %1391 = vmatmul.mubr.f32.gmra.mxu0 %v1223
        %v1392 = vpop.f32.mrf.mxu0
        %v1393 = vadd.f32 %v1207, %v1392
        %v1394 = vpop.f32.mrf.mxu0
        %1395 = vmatprep.mubr.f32.mxu0 0.0
        %1396 = vmatmul.mubr.f32.gmra.mxu0 %v1226
        %v1397 = vpop.f32.mrf.mxu0
        %v1398 = vadd.f32 %v1207, %v1397
        %v1399 = vpop.f32.mrf.mxu0
        %1400 = vmatprep.mubr.f32.mxu0 0.0
        %1401 = vmatmul.mubr.f32.gmra.mxu0 %v1229
        %v1402 = vpop.f32.mrf.mxu0
        %v1403 = vadd.f32 %v1207, %v1402
        %v1404 = vpop.f32.mrf.mxu0
        %1405 = vmatprep.mubr.f32.mxu0 0.0
        %1406 = vmatmul.mubr.f32.gmra.mxu0 %v1232
        %v1407 = vpop.f32.mrf.mxu0
        %v1408 = vadd.f32 %v1207, %v1407
        %v1409 = vpop.f32.mrf.mxu0
        %1410 = vmatprep.mubr.f32.mxu0 0.0
        %1411 = vmatmul.mubr.f32.gmra.mxu0 %v1235
        %v1412 = vpop.f32.mrf.mxu0
        %v1413 = vadd.f32 %v1207, %v1412
        %v1414 = vpop.f32.mrf.mxu0
        %1415 = vmatprep.mubr.f32.mxu0 0.0
        %1416 = vmatmul.mubr.f32.gmra.mxu0 %v1238
        %v1417 = vpop.f32.mrf.mxu0
        %v1418 = vadd.f32 %v1207, %v1417
        %v1419 = vpop.f32.mrf.mxu0
        %1420 = vmatprep.mubr.f32.mxu0 0.0
        %1421 = vmatmul.mubr.f32.gmra.mxu0 %v1241
        %v1422 = vpop.f32.mrf.mxu0
        %v1423 = vadd.f32 %v1207, %v1422
        %v1424 = vpop.f32.mrf.mxu0
        %1425 = vmatprep.mubr.f32.mxu0 0.0
        %1426 = vmatmul.mubr.f32.gmra.mxu0 %v1244
        %v1427 = vpop.f32.mrf.mxu0
        %v1428 = vadd.f32 %v1207, %v1427
        %v1429 = vpop.f32.mrf.mxu0
        %1430 = vmatprep.mubr.f32.mxu0 0.0
        %1431 = vmatmul.mubr.f32.gmra.mxu0 %v1247
        %v1432 = vpop.f32.mrf.mxu0
        %v1433 = vadd.f32 %v1207, %v1432
        %v1434 = vpop.f32.mrf.mxu0
        %1435 = vmatprep.mubr.f32.mxu0 0.0
        %1436 = vmatmul.mubr.f32.gmra.mxu0 %v1250
        %v1437 = vpop.f32.mrf.mxu0
        %v1438 = vadd.f32 %v1207, %v1437
        %v1439 = vpop.f32.mrf.mxu0
        %1440 = vmatprep.mubr.f32.mxu0 0.0
        %1441 = vmatmul.mubr.f32.gmra.mxu0 %v1253
        %v1442 = vpop.f32.mrf.mxu0
        %v1443 = vadd.f32 %v1207, %v1442
        %v1444 = vpop.f32.mrf.mxu0
        %1445 = vmatprep.mubr.f32.mxu0 0.0
        %1446 = vmatmul.mubr.f32.gmra.mxu0 %v1256
        %v1447 = vpop.f32.mrf.mxu0
        %v1448 = vadd.f32 %v1207, %v1447
        %v1449 = vpop.f32.mrf.mxu0
        %1450 = vmatprep.mubr.f32.mxu0 0.0
        %1451 = vmatmul.mubr.f32.gmra.mxu0 %v1259
        %v1452 = vpop.f32.mrf.mxu0
        %v1453 = vadd.f32 %v1207, %v1452
        %v1454 = vpop.f32.mrf.mxu0
        %1455 = vmatprep.mubr.f32.mxu0 0.0
        %1456 = vmatmul.mubr.f32.gmra.mxu0 %v1262
        %v1457 = vpop.f32.mrf.mxu0
        %v1458 = vadd.f32 %v1207, %v1457
        %v1459 = vpop.f32.mrf.mxu0
        %1460 = vmatprep.mubr.f32.mxu0 0.0
        %1461 = vmatmul.mubr.f32.gmra.mxu0 %v1265
        %v1462 = vpop.f32.mrf.mxu0
        %v1463 = vadd.f32 %v1207, %v1462
        %v1464 = vpop.f32.mrf.mxu0
        %1465 = vmatprep.mubr.f32.mxu0 0.0
        %1466 = vmatmul.mubr.f32.gmra.mxu0 %v1268
        %v1467 = vpop.f32.mrf.mxu0
        %v1468 = vadd.f32 %v1207, %v1467
        %v1469 = vpop.f32.mrf.mxu0
        %1470 = vmatprep.mubr.f32.mxu0 0.0
        %1471 = vmatmul.mubr.f32.gmra.mxu0 %v1271
        %v1472 = vpop.f32.mrf.mxu0
        %v1473 = vadd.f32 %v1207, %v1472
        %v1474 = vpop.f32.mrf.mxu0
        %1475 = vmatprep.mubr.f32.mxu0 0.0
        %1476 = vmatmul.mubr.f32.gmra.mxu0 %v1274
        %v1477 = vpop.f32.mrf.mxu0
        %v1478 = vadd.f32 %v1207, %v1477
        %v1479 = vpop.f32.mrf.mxu0
        %1480 = vmatprep.mubr.f32.mxu0 0.0
        %1481 = vmatmul.mubr.f32.gmra.mxu0 %v1277
        %v1482 = vpop.f32.mrf.mxu0
        %v1483 = vadd.f32 %v1207, %v1482
        %v1484 = vpop.f32.mrf.mxu0
        %1485 = vmatprep.mubr.f32.mxu0 0.0
        %1486 = vmatmul.mubr.f32.gmra.mxu0 %v1280
        %v1487 = vpop.f32.mrf.mxu0
        %v1488 = vadd.f32 %v1207, %v1487
        %v1489 = vpop.f32.mrf.mxu0
        %1490 = vmatprep.mubr.f32.mxu0 0.0
        %1491 = vmatmul.mubr.f32.gmra.mxu0 %v1283
        %v1492 = vpop.f32.mrf.mxu0
        %v1493 = vadd.f32 %v1207, %v1492
        %v1494 = vpop.f32.mrf.mxu0
        %1495 = vmatprep.mubr.f32.mxu0 0.0
        %1496 = vmatmul.mubr.f32.gmra.mxu0 %v1286
        %v1497 = vpop.f32.mrf.mxu0
        %v1498 = vadd.f32 %v1207, %v1497
        %v1499 = vpop.f32.mrf.mxu0
        %1500 = vmatprep.mubr.f32.mxu0 0.0
        %1501 = vmatmul.mubr.f32.gmra.mxu0 %v1289
        %v1502 = vpop.f32.mrf.mxu0
        %v1503 = vadd.f32 %v1207, %v1502
        %v1504 = vpop.f32.mrf.mxu0
        %1505 = vmatprep.mubr.f32.mxu0 0.0
        %1506 = vmatmul.mubr.f32.gmra.mxu0 %v1292
        %v1507 = vpop.f32.mrf.mxu0
        %v1508 = vadd.f32 %v1207, %v1507
        %v1509 = vpop.f32.mrf.mxu0
        %1510 = vmatprep.mubr.f32.mxu0 0.0
        %1511 = vmatmul.mubr.f32.gmra.mxu0 %v1295
        %v1512 = vpop.f32.mrf.mxu0
        %v1513 = vadd.f32 %v1207, %v1512
        %v1514 = vpop.f32.mrf.mxu0
        %1515 = vmatprep.mubr.f32.mxu0 0.0
        %1516 = vmatmul.mubr.f32.gmra.mxu0 %v1298
        %v1517 = vpop.f32.mrf.mxu0
        %v1518 = vadd.f32 %v1207, %v1517
        %v1519 = vpop.f32.mrf.mxu0
        %1520 = vmatprep.mubr.f32.mxu0 0.0
        %1521 = vmatmul.mubr.f32.gmra.mxu0 %v1301
        %v1522 = vpop.f32.mrf.mxu0
        %v1523 = vadd.f32 %v1207, %v1522
        %v1524 = vpop.f32.mrf.mxu0
        %1525 = vmatprep.mubr.f32.mxu0 0.0
        %1526 = vmatmul.mubr.f32.gmra.mxu0 %v1304
        %v1527 = vpop.f32.mrf.mxu0
        %v1528 = vadd.f32 %v1207, %v1527
        %v1529 = vpop.f32.mrf.mxu0
        %1530 = vdwg.mxu0
        %v1531 = vmax.f32 %v1373, 0.0
        %v1532 = vmax.f32 %v1378, 0.0
        %v1533 = vmax.f32 %v1383, 0.0
        %v1534 = vmax.f32 %v1388, 0.0
        %v1535 = vmax.f32 %v1393, 0.0
        %v1536 = vmax.f32 %v1398, 0.0
        %v1537 = vmax.f32 %v1403, 0.0
        %v1538 = vmax.f32 %v1408, 0.0
        %v1539 = vmax.f32 %v1413, 0.0
        %v1540 = vmax.f32 %v1418, 0.0
        %v1541 = vmax.f32 %v1423, 0.0
        %v1542 = vmax.f32 %v1428, 0.0
        %v1543 = vmax.f32 %v1433, 0.0
        %v1544 = vmax.f32 %v1438, 0.0
        %v1545 = vmax.f32 %v1443, 0.0
        %v1546 = vmax.f32 %v1448, 0.0
        %v1547 = vmax.f32 %v1453, 0.0
        %v1548 = vmax.f32 %v1458, 0.0
        %v1549 = vmax.f32 %v1463, 0.0
        %v1550 = vmax.f32 %v1468, 0.0
        %v1551 = vmax.f32 %v1473, 0.0
        %v1552 = vmax.f32 %v1478, 0.0
        %v1553 = vmax.f32 %v1483, 0.0
        %v1554 = vmax.f32 %v1488, 0.0
        %v1555 = vmax.f32 %v1493, 0.0
        %v1556 = vmax.f32 %v1498, 0.0
        %v1557 = vmax.f32 %v1503, 0.0
        %v1558 = vmax.f32 %v1508, 0.0
        %v1559 = vmax.f32 %v1513, 0.0
        %v1560 = vmax.f32 %v1518, 0.0
        %v1561 = vmax.f32 %v1523, 0.0
        %v1562 = vmax.f32 %v1528, 0.0
        %v1563 = vmax.f32 %v1531, %v1535
        %v1564 = vmax.f32 %v1532, %v1536
        %v1565 = vmax.f32 %v1533, %v1537
        %v1566 = vmax.f32 %v1534, %v1538
        %v1567 = vmax.f32 %v1539, %v1543
        %v1568 = vmax.f32 %v1540, %v1544
        %v1569 = vmax.f32 %v1541, %v1545
        %v1570 = vmax.f32 %v1542, %v1546
        %v1571 = vmax.f32 %v1547, %v1551
        %v1572 = vmax.f32 %v1548, %v1552
        %v1573 = vmax.f32 %v1549, %v1553
        %v1574 = vmax.f32 %v1550, %v1554
        %v1575 = vmax.f32 %v1555, %v1559
        %v1576 = vmax.f32 %v1556, %v1560
        %v1577 = vmax.f32 %v1557, %v1561
        %v1578 = vmax.f32 %v1558, %v1562
        %1595 = vrot.lane.b32.xlu0 %v1563, 64
        %v1596 = vpop.permute.xlu0 %1595
        %1597 = vrot.lane.b32.xlu0 %v1564, 64
        %v1598 = vpop.permute.xlu0 %1597
        %1599 = vrot.lane.b32.xlu0 %v1565, 64
        %v1600 = vpop.permute.xlu0 %1599
        %1601 = vrot.lane.b32.xlu0 %v1566, 64
        %v1602 = vpop.permute.xlu0 %1601
        %1603 = vrot.lane.b32.xlu0 %v1567, 64
        %v1604 = vpop.permute.xlu0 %1603
        %1605 = vrot.lane.b32.xlu0 %v1568, 64
        %v1606 = vpop.permute.xlu0 %1605
        %1607 = vrot.lane.b32.xlu0 %v1569, 64
        %v1608 = vpop.permute.xlu0 %1607
        %1609 = vrot.lane.b32.xlu0 %v1570, 64
        %v1610 = vpop.permute.xlu0 %1609
        %1611 = vrot.lane.b32.xlu0 %v1571, 64
        %v1612 = vpop.permute.xlu0 %1611
        %1613 = vrot.lane.b32.xlu0 %v1572, 64
        %v1614 = vpop.permute.xlu0 %1613
        %1615 = vrot.lane.b32.xlu0 %v1573, 64
        %v1616 = vpop.permute.xlu0 %1615
        %1617 = vrot.lane.b32.xlu0 %v1574, 64
        %v1618 = vpop.permute.xlu0 %1617
        %1619 = vrot.lane.b32.xlu0 %v1575, 64
        %v1620 = vpop.permute.xlu0 %1619
        %1621 = vrot.lane.b32.xlu0 %v1576, 64
        %v1622 = vpop.permute.xlu0 %1621
        %1623 = vrot.lane.b32.xlu0 %v1577, 64
        %v1624 = vpop.permute.xlu0 %1623
        %1625 = vrot.lane.b32.xlu0 %v1578, 64
        %v1626 = vpop.permute.xlu0 %1625
        %v1643 = vsel %vm1157, 0.0, %v1596
        %v1644 = vsel %vm1157, 0.0, %v1598
        %v1645 = vsel %vm1157, 0.0, %v1600
        %v1646 = vsel %vm1157, 0.0, %v1602
        %v1647 = vsel %vm1157, %v1563, %v1604
        %v1648 = vsel %vm1157, %v1564, %v1606
        %v1649 = vsel %vm1157, %v1565, %v1608
        %v1650 = vsel %vm1157, %v1566, %v1610
        %v1651 = vsel %vm1157, %v1567, %v1612
        %v1652 = vsel %vm1157, %v1568, %v1614
        %v1653 = vsel %vm1157, %v1569, %v1616
        %v1654 = vsel %vm1157, %v1570, %v1618
        %v1655 = vsel %vm1157, %v1571, %v1620
        %v1656 = vsel %vm1157, %v1572, %v1622
        %v1657 = vsel %vm1157, %v1573, %v1624
        %v1658 = vsel %vm1157, %v1574, %v1626
        %v1659 = vld [vmem:[#allocation2] sm:$0xff]
        %v1660 = vld [vmem:[#allocation2 + $0x8] sm:$0xff]
        %v1661 = vld [vmem:[#allocation2 + $0x10] sm:$0xff]
        %v1662 = vld [vmem:[#allocation2 + $0x18] sm:$0xff]
        %v1663 = vld [vmem:[#allocation2 + $0x20] sm:$0xff]
        %v1664 = vld [vmem:[#allocation2 + $0x28] sm:$0xff]
        %v1665 = vld [vmem:[#allocation2 + $0x30] sm:$0xff]
        %v1666 = vld [vmem:[#allocation2 + $0x38] sm:$0xff]
        %v1667 = vld [vmem:[#allocation2 + $0x40] sm:$0xff]
        %v1668 = vld [vmem:[#allocation2 + $0x48] sm:$0xff]
        %v1669 = vld [vmem:[#allocation2 + $0x50] sm:$0xff]
        %v1670 = vld [vmem:[#allocation2 + $0x58] sm:$0xff]
        %v1671 = vld [vmem:[#allocation2 + $0x60] sm:$0xff]
        %v1672 = vld [vmem:[#allocation2 + $0x68] sm:$0xff]
        %v1673 = vld [vmem:[#allocation2 + $0x70] sm:$0xff]
        %v1674 = vld [vmem:[#allocation2 + $0x78] sm:$0xff]
        %v1675 = vld [vmem:[#allocation2 + $0x80] sm:$0xff]
        %v1676 = vld [vmem:[#allocation2 + $0x88] sm:$0xff]
        %v1677 = vld [vmem:[#allocation2 + $0x90] sm:$0xff]
        %v1678 = vld [vmem:[#allocation2 + $0x98] sm:$0xff]
        %v1679 = vld [vmem:[#allocation2 + $0xa0] sm:$0xff]
        %v1680 = vld [vmem:[#allocation2 + $0xa8] sm:$0xff]
        %v1681 = vld [vmem:[#allocation2 + $0xb0] sm:$0xff]
        %v1682 = vld [vmem:[#allocation2 + $0xb8] sm:$0xff]
        %v1683 = vld [vmem:[%s6] sm:$0x1]
        %v1685 = vlaneseq
        %v1686 = vshrl.u32 %v1685, 7
        %v1687 = vsub.s32 0, %v1686
        %v1688 = vrot.slane %v1683, %v1687
        %v1690 = vsel %vm1157, %v1567, 0
        %v1692 = vsel %vm1157, %v1568, 0
        %v1694 = vsel %vm1157, %v1569, 0
        %v1696 = vsel %vm1157, %v1570, 0
        %v1698 = vsel %vm1157, %v1571, 0
        %v1700 = vsel %vm1157, %v1572, 0
        %v1702 = vsel %vm1157, %v1573, 0
        %v1704 = vsel %vm1157, %v1574, 0
        %v1706 = vsel %vm1157, %v1575, 0
        %v1708 = vsel %vm1157, %v1576, 0
        %v1710 = vsel %vm1157, %v1577, 0
        %v1712 = vsel %vm1157, %v1578, 0
        %v1714 = vsel %vm1157, 0.0, 0
        %1716 = vmatprep.subr.mxu0 0.0
        %1717 = vmatpush1.msra.mxu0 %v1674
        %1718 = vmatprep.subr.mxu0 0.0
        %1719 = vmatpush1.msra.mxu0 %v1673
        %1720 = vmatprep.subr.mxu0 0.0
        %1721 = vmatpush1.msra.mxu0 %v1672
        %1722 = vmatprep.subr.mxu0 0.0
        %1723 = vmatpush1.msra.mxu0 %v1671
        %1724 = vmatprep.subr.mxu0 0.0
        %1725 = vmatpush1.msra.mxu0 %v1670
        %1726 = vmatprep.subr.mxu0 0.0
        %1727 = vmatpush1.msra.mxu0 %v1669
        %1728 = vmatprep.subr.mxu0 0.0
        %1729 = vmatpush1.msra.mxu0 %v1668
        %1730 = vmatprep.subr.mxu0 0.0
        %1731 = vmatpush1.msra.mxu0 %v1667
        %1732 = vmatprep.subr.mxu0 0.0
        %1733 = vmatpush1.msra.mxu0 %v1666
        %1734 = vmatprep.subr.mxu0 0.0
        %1735 = vmatpush1.msra.mxu0 %v1665
        %1736 = vmatprep.subr.mxu0 0.0
        %1737 = vmatpush1.msra.mxu0 %v1664
        %1738 = vmatprep.subr.mxu0 0.0
        %1739 = vmatpush1.msra.mxu0 %v1663
        %1740 = vmatprep.subr.mxu0 0.0
        %1741 = vmatpush1.msra.mxu0 %v1662
        %1742 = vmatprep.subr.mxu0 0.0
        %1743 = vmatpush1.msra.mxu0 %v1661
        %1744 = vmatprep.subr.mxu0 0.0
        %1745 = vmatpush1.msra.mxu0 %v1660
        %1746 = vmatprep.subr.mxu0 0.0
        %1747 = vmatpush1.msra.mxu0 %v1659
        %1748 = vmatprep.subr.mxu0 0.0
        %1749 = vmatpush2.msra.mxu0 0.0
        %1750 = vmatprep.subr.mxu0 0.0
        %1751 = vmatpush2.msra.mxu0 0.0
        %1752 = vmatprep.subr.mxu0 0.0
        %1753 = vmatpush2.msra.mxu0 0.0
        %1754 = vmatprep.subr.mxu0 0.0
        %1755 = vmatpush2.msra.mxu0 0.0
        %1756 = vmatprep.subr.mxu0 0.0
        %1757 = vmatpush2.msra.mxu0 0.0
        %1758 = vmatprep.subr.mxu0 0.0
        %1759 = vmatpush2.msra.mxu0 0.0
        %1760 = vmatprep.subr.mxu0 0.0
        %1761 = vmatpush2.msra.mxu0 0.0
        %1762 = vmatprep.subr.mxu0 0.0
        %1763 = vmatpush2.msra.mxu0 0.0
        %1764 = vmatprep.subr.mxu0 0.0
        %1765 = vmatpush2.msra.mxu0 %v1682
        %1766 = vmatprep.subr.mxu0 0.0
        %1767 = vmatpush2.msra.mxu0 %v1681
        %1768 = vmatprep.subr.mxu0 0.0
        %1769 = vmatpush2.msra.mxu0 %v1680
        %1770 = vmatprep.subr.mxu0 0.0
        %1771 = vmatpush2.msra.mxu0 %v1679
        %1772 = vmatprep.subr.mxu0 0.0
        %1773 = vmatpush2.msra.mxu0 %v1678
        %1774 = vmatprep.subr.mxu0 0.0
        %1775 = vmatpush2.msra.mxu0 %v1677
        %1776 = vmatprep.subr.mxu0 0.0
        %1777 = vmatpush2.msra.mxu0 %v1676
        %1778 = vmatprep.subr.mxu0 0.0
        %1779 = vmatpush2.msra.mxu0 %v1675
        %1780 = vmatprep.mubr.f32.mxu0 %v1690
        %1781 = vmatmul.mubr.f32.gmra.mxu0 %v1643
        %v1782 = vpop.f32.mrf.mxu0
        %v1783 = vadd.f32 %v1688, %v1782
        %v1784 = vpop.f32.mrf.mxu0
        %1785 = vmatprep.mubr.f32.mxu0 %v1692
        %1786 = vmatmul.mubr.f32.gmra.mxu0 %v1644
        %v1787 = vpop.f32.mrf.mxu0
        %v1788 = vadd.f32 %v1688, %v1787
        %v1789 = vpop.f32.mrf.mxu0
        %1790 = vmatprep.mubr.f32.mxu0 %v1694
        %1791 = vmatmul.mubr.f32.gmra.mxu0 %v1645
        %v1792 = vpop.f32.mrf.mxu0
        %v1793 = vadd.f32 %v1688, %v1792
        %v1794 = vpop.f32.mrf.mxu0
        %1795 = vmatprep.mubr.f32.mxu0 %v1696
        %1796 = vmatmul.mubr.f32.gmra.mxu0 %v1646
        %v1797 = vpop.f32.mrf.mxu0
        %v1798 = vadd.f32 %v1688, %v1797
        %v1799 = vpop.f32.mrf.mxu0
        %1800 = vmatprep.mubr.f32.mxu0 %v1698
        %1801 = vmatmul.mubr.f32.gmra.mxu0 %v1647
        %v1802 = vpop.f32.mrf.mxu0
        %v1803 = vadd.f32 %v1688, %v1802
        %v1804 = vpop.f32.mrf.mxu0
        %1805 = vmatprep.mubr.f32.mxu0 %v1700
        %1806 = vmatmul.mubr.f32.gmra.mxu0 %v1648
        %v1807 = vpop.f32.mrf.mxu0
        %v1808 = vadd.f32 %v1688, %v1807
        %v1809 = vpop.f32.mrf.mxu0
        %1810 = vmatprep.mubr.f32.mxu0 %v1702
        %1811 = vmatmul.mubr.f32.gmra.mxu0 %v1649
        %v1812 = vpop.f32.mrf.mxu0
        %v1813 = vadd.f32 %v1688, %v1812
        %v1814 = vpop.f32.mrf.mxu0
        %1815 = vmatprep.mubr.f32.mxu0 %v1704
        %1816 = vmatmul.mubr.f32.gmra.mxu0 %v1650
        %v1817 = vpop.f32.mrf.mxu0
        %v1818 = vadd.f32 %v1688, %v1817
        %v1819 = vpop.f32.mrf.mxu0
        %1820 = vmatprep.mubr.f32.mxu0 %v1706
        %1821 = vmatmul.mubr.f32.gmra.mxu0 %v1651
        %v1822 = vpop.f32.mrf.mxu0
        %v1823 = vadd.f32 %v1688, %v1822
        %v1824 = vpop.f32.mrf.mxu0
        %1825 = vmatprep.mubr.f32.mxu0 %v1708
        %1826 = vmatmul.mubr.f32.gmra.mxu0 %v1652
        %v1827 = vpop.f32.mrf.mxu0
        %v1828 = vadd.f32 %v1688, %v1827
        %v1829 = vpop.f32.mrf.mxu0
        %1830 = vmatprep.mubr.f32.mxu0 %v1710
        %1831 = vmatmul.mubr.f32.gmra.mxu0 %v1653
        %v1832 = vpop.f32.mrf.mxu0
        %v1833 = vadd.f32 %v1688, %v1832
        %v1834 = vpop.f32.mrf.mxu0
        %1835 = vmatprep.mubr.f32.mxu0 %v1712
        %1836 = vmatmul.mubr.f32.gmra.mxu0 %v1654
        %v1837 = vpop.f32.mrf.mxu0
        %v1838 = vadd.f32 %v1688, %v1837
        %v1839 = vpop.f32.mrf.mxu0
        %1840 = vmatprep.mubr.f32.mxu0 %v1714
        %1841 = vmatmul.mubr.f32.gmra.mxu0 %v1655
        %v1842 = vpop.f32.mrf.mxu0
        %v1843 = vadd.f32 %v1688, %v1842
        %v1844 = vpop.f32.mrf.mxu0
        %1845 = vmatprep.mubr.f32.mxu0 %v1714
        %1846 = vmatmul.mubr.f32.gmra.mxu0 %v1656
        %v1847 = vpop.f32.mrf.mxu0
        %v1848 = vadd.f32 %v1688, %v1847
        %v1849 = vpop.f32.mrf.mxu0
        %1850 = vmatprep.mubr.f32.mxu0 %v1714
        %1851 = vmatmul.mubr.f32.gmra.mxu0 %v1657
        %v1852 = vpop.f32.mrf.mxu0
        %v1853 = vadd.f32 %v1688, %v1852
        %v1854 = vpop.f32.mrf.mxu0
        %1855 = vmatprep.mubr.f32.mxu0 %v1714
        %1856 = vmatmul.mubr.f32.gmra.mxu0 %v1658
        %v1857 = vpop.f32.mrf.mxu0
        %v1858 = vadd.f32 %v1688, %v1857
        %v1859 = vpop.f32.mrf.mxu0
        %1860 = vdwg.mxu0
        %v1861 = vmax.f32 %v1783, 0.0
        %v1862 = vmax.f32 %v1788, 0.0
        %v1863 = vmax.f32 %v1793, 0.0
        %v1864 = vmax.f32 %v1798, 0.0
        %v1865 = vmax.f32 %v1803, 0.0
        %v1866 = vmax.f32 %v1808, 0.0
        %v1867 = vmax.f32 %v1813, 0.0
        %v1868 = vmax.f32 %v1818, 0.0
        %v1869 = vmax.f32 %v1823, 0.0
        %v1870 = vmax.f32 %v1828, 0.0
        %v1871 = vmax.f32 %v1833, 0.0
        %v1872 = vmax.f32 %v1838, 0.0
        %v1873 = vmax.f32 %v1843, 0.0
        %v1874 = vmax.f32 %v1848, 0.0
        %v1875 = vmax.f32 %v1853, 0.0
        %v1876 = vmax.f32 %v1858, 0.0
        %v1877 = vld [vmem:[#allocation5] sm:$0xff]
        %v1878 = vld [vmem:[#allocation5 + $0x8] sm:$0xff]
        %v1879 = vld [vmem:[#allocation5 + $0x10] sm:$0xff]
        %v1880 = vld [vmem:[#allocation5 + $0x18] sm:$0xff]
        %v1881 = vld [vmem:[#allocation5 + $0x20] sm:$0xff]
        %v1882 = vld [vmem:[#allocation5 + $0x28] sm:$0xff]
        %v1883 = vld [vmem:[#allocation5 + $0x30] sm:$0xff]
        %v1884 = vld [vmem:[#allocation5 + $0x38] sm:$0xff]
        %v1885 = vld [vmem:[#allocation5 + $0x40] sm:$0xff]
        %v1886 = vld [vmem:[#allocation5 + $0x48] sm:$0xff]
        %v1887 = vld [vmem:[#allocation5 + $0x50] sm:$0xff]
        %v1888 = vld [vmem:[#allocation5 + $0x58] sm:$0xff]
        %v1889 = vld [vmem:[#allocation5 + $0x60] sm:$0xff]
        %v1890 = vld [vmem:[#allocation5 + $0x68] sm:$0xff]
        %v1891 = vld [vmem:[#allocation5 + $0x70] sm:$0xff]
        %v1892 = vld [vmem:[#allocation5 + $0x78] sm:$0xff]
        %v1893 = vld [vmem:[#allocation5 + $0x80] sm:$0xff]
        %v1894 = vld [vmem:[#allocation5 + $0x88] sm:$0xff]
        %v1895 = vld [vmem:[#allocation5 + $0x90] sm:$0xff]
        %v1896 = vld [vmem:[#allocation5 + $0x98] sm:$0xff]
        %v1897 = vld [vmem:[#allocation5 + $0xa0] sm:$0xff]
        %v1898 = vld [vmem:[#allocation5 + $0xa8] sm:$0xff]
        %v1899 = vld [vmem:[#allocation5 + $0xb0] sm:$0xff]
        %v1900 = vld [vmem:[#allocation5 + $0xb8] sm:$0xff]
        %v1901 = vld [vmem:[#allocation5 + $0xc0] sm:$0xff]
        %v1902 = vld [vmem:[#allocation5 + $0xc8] sm:$0xff]
        %v1903 = vld [vmem:[#allocation5 + $0xd0] sm:$0xff]
        %v1904 = vld [vmem:[#allocation5 + $0xd8] sm:$0xff]
        %v1905 = vld [vmem:[#allocation5 + $0xe0] sm:$0xff]
        %v1906 = vld [vmem:[#allocation5 + $0xe8] sm:$0xff]
        %v1907 = vld [vmem:[#allocation5 + $0xf0] sm:$0xff]
        %v1908 = vld [vmem:[#allocation5 + $0xf8] sm:$0xff]
        %v1909 = vld [vmem:[#allocation5 + $0x100] sm:$0xff]
        %v1910 = vld [vmem:[#allocation5 + $0x108] sm:$0xff]
        %v1911 = vld [vmem:[#allocation5 + $0x110] sm:$0xff]
        %v1912 = vld [vmem:[#allocation5 + $0x118] sm:$0xff]
        %v1913 = vld [vmem:[#allocation5 + $0x120] sm:$0xff]
        %v1914 = vld [vmem:[#allocation5 + $0x128] sm:$0xff]
        %v1915 = vld [vmem:[#allocation5 + $0x130] sm:$0xff]
        %v1916 = vld [vmem:[#allocation5 + $0x138] sm:$0xff]
        %v1917 = vld [vmem:[#allocation5 + $0x140] sm:$0xff]
        %v1918 = vld [vmem:[#allocation5 + $0x148] sm:$0xff]
        %v1919 = vld [vmem:[#allocation5 + $0x150] sm:$0xff]
        %v1920 = vld [vmem:[#allocation5 + $0x158] sm:$0xff]
        %v1921 = vld [vmem:[#allocation5 + $0x160] sm:$0xff]
        %v1922 = vld [vmem:[#allocation5 + $0x168] sm:$0xff]
        %v1923 = vld [vmem:[#allocation5 + $0x170] sm:$0xff]
        %v1924 = vld [vmem:[#allocation5 + $0x178] sm:$0xff]
        %v1925 = vld [vmem:[#allocation5 + $0x180] sm:$0xff]
        %v1926 = vld [vmem:[#allocation5 + $0x188] sm:$0xff]
        %v1927 = vld [vmem:[#allocation5 + $0x190] sm:$0xff]
        %v1928 = vld [vmem:[#allocation5 + $0x198] sm:$0xff]
        %v1929 = vld [vmem:[#allocation5 + $0x1a0] sm:$0xff]
        %v1930 = vld [vmem:[#allocation5 + $0x1a8] sm:$0xff]
        %v1931 = vld [vmem:[#allocation5 + $0x1b0] sm:$0xff]
        %v1932 = vld [vmem:[#allocation5 + $0x1b8] sm:$0xff]
        %v1933 = vld [vmem:[#allocation5 + $0x1c0] sm:$0xff]
        %v1934 = vld [vmem:[#allocation5 + $0x1c8] sm:$0xff]
        %v1935 = vld [vmem:[#allocation5 + $0x1d0] sm:$0xff]
        %v1936 = vld [vmem:[#allocation5 + $0x1d8] sm:$0xff]
        %v1937 = vld [vmem:[#allocation5 + $0x1e0] sm:$0xff]
        %v1938 = vld [vmem:[#allocation5 + $0x1e8] sm:$0xff]
        %v1939 = vld [vmem:[#allocation5 + $0x1f0] sm:$0xff]
        %v1940 = vld [vmem:[#allocation5 + $0x1f8] sm:$0xff]
        %v1941 = vld [vmem:[#allocation5 + $0x200] sm:$0xff]
        %v1942 = vld [vmem:[#allocation5 + $0x208] sm:$0xff]
        %v1943 = vld [vmem:[#allocation5 + $0x210] sm:$0xff]
        %v1944 = vld [vmem:[#allocation5 + $0x218] sm:$0xff]
        %v1945 = vld [vmem:[#allocation5 + $0x220] sm:$0xff]
        %v1946 = vld [vmem:[#allocation5 + $0x228] sm:$0xff]
        %v1947 = vld [vmem:[#allocation5 + $0x230] sm:$0xff]
        %v1948 = vld [vmem:[#allocation5 + $0x238] sm:$0xff]
        %v1949 = vld [vmem:[#allocation5 + $0x240] sm:$0xff]
        %v1950 = vld [vmem:[#allocation5 + $0x248] sm:$0xff]
        %v1951 = vld [vmem:[#allocation5 + $0x250] sm:$0xff]
        %v1952 = vld [vmem:[#allocation5 + $0x258] sm:$0xff]
        %v1953 = vld [vmem:[#allocation5 + $0x260] sm:$0xff]
        %v1954 = vld [vmem:[#allocation5 + $0x268] sm:$0xff]
        %v1955 = vld [vmem:[#allocation5 + $0x270] sm:$0xff]
        %v1956 = vld [vmem:[#allocation5 + $0x278] sm:$0xff]
        %v1957 = vld [vmem:[#allocation5 + $0x280] sm:$0xff]
        %v1958 = vld [vmem:[#allocation5 + $0x288] sm:$0xff]
        %v1959 = vld [vmem:[#allocation5 + $0x290] sm:$0xff]
        %v1960 = vld [vmem:[#allocation5 + $0x298] sm:$0xff]
        %v1961 = vld [vmem:[#allocation5 + $0x2a0] sm:$0xff]
        %v1962 = vld [vmem:[#allocation5 + $0x2a8] sm:$0xff]
        %v1963 = vld [vmem:[#allocation5 + $0x2b0] sm:$0xff]
        %v1964 = vld [vmem:[#allocation5 + $0x2b8] sm:$0xff]
        %v1965 = vld [vmem:[#allocation5 + $0x2c0] sm:$0xff]
        %v1966 = vld [vmem:[#allocation5 + $0x2c8] sm:$0xff]
        %v1967 = vld [vmem:[#allocation5 + $0x2d0] sm:$0xff]
        %v1968 = vld [vmem:[#allocation5 + $0x2d8] sm:$0xff]
        %v1969 = vld [vmem:[#allocation5 + $0x2e0] sm:$0xff]
        %v1970 = vld [vmem:[#allocation5 + $0x2e8] sm:$0xff]
        %v1971 = vld [vmem:[#allocation5 + $0x2f0] sm:$0xff]
        %v1972 = vld [vmem:[#allocation5 + $0x2f8] sm:$0xff]
        %v1973 = vld [vmem:[%s8] sm:$0x3]
        %v1975 = vlaneseq
        %v1976 = vshrl.u32 %v1975, 7
        %v1977 = vsub.s32 0, %v1976
        %v1978 = vrot.slane %v1973, %v1977
        %v1979 = vlaneseq
        %v1980 = vshrl.u32 %v1979, 7
        %v1981 = vsub.s32 1, %v1980
        %v1982 = vrot.slane %v1973, %v1981
        %1985 = vmatprep.subr.mxu0 %v1908
        %1986 = vmatpush1.msra.mxu0 %v1907
        %1987 = vmatprep.subr.mxu0 %v1906
        %1988 = vmatpush1.msra.mxu0 %v1905
        %1989 = vmatprep.subr.mxu0 %v1904
        %1990 = vmatpush1.msra.mxu0 %v1903
        %1991 = vmatprep.subr.mxu0 %v1902
        %1992 = vmatpush1.msra.mxu0 %v1901
        %1993 = vmatprep.subr.mxu0 %v1900
        %1994 = vmatpush1.msra.mxu0 %v1899
        %1995 = vmatprep.subr.mxu0 %v1898
        %1996 = vmatpush1.msra.mxu0 %v1897
        %1997 = vmatprep.subr.mxu0 %v1896
        %1998 = vmatpush1.msra.mxu0 %v1895
        %1999 = vmatprep.subr.mxu0 %v1894
        %2000 = vmatpush1.msra.mxu0 %v1893
        %2001 = vmatprep.subr.mxu0 %v1892
        %2002 = vmatpush1.msra.mxu0 %v1891
        %2003 = vmatprep.subr.mxu0 %v1890
        %2004 = vmatpush1.msra.mxu0 %v1889
        %2005 = vmatprep.subr.mxu0 %v1888
        %2006 = vmatpush1.msra.mxu0 %v1887
        %2007 = vmatprep.subr.mxu0 %v1886
        %2008 = vmatpush1.msra.mxu0 %v1885
        %2009 = vmatprep.subr.mxu0 %v1884
        %2010 = vmatpush1.msra.mxu0 %v1883
        %2011 = vmatprep.subr.mxu0 %v1882
        %2012 = vmatpush1.msra.mxu0 %v1881
        %2013 = vmatprep.subr.mxu0 %v1880
        %2014 = vmatpush1.msra.mxu0 %v1879
        %2015 = vmatprep.subr.mxu0 %v1878
        %2016 = vmatpush1.msra.mxu0 %v1877
        %2017 = vmatprep.subr.mxu0 %v1940
        %2018 = vmatpush2.msra.mxu0 %v1939
        %2019 = vmatprep.subr.mxu0 %v1938
        %2020 = vmatpush2.msra.mxu0 %v1937
        %2021 = vmatprep.subr.mxu0 %v1936
        %2022 = vmatpush2.msra.mxu0 %v1935
        %2023 = vmatprep.subr.mxu0 %v1934
        %2024 = vmatpush2.msra.mxu0 %v1933
        %2025 = vmatprep.subr.mxu0 %v1932
        %2026 = vmatpush2.msra.mxu0 %v1931
        %2027 = vmatprep.subr.mxu0 %v1930
        %2028 = vmatpush2.msra.mxu0 %v1929
        %2029 = vmatprep.subr.mxu0 %v1928
        %2030 = vmatpush2.msra.mxu0 %v1927
        %2031 = vmatprep.subr.mxu0 %v1926
        %2032 = vmatpush2.msra.mxu0 %v1925
        %2033 = vmatprep.subr.mxu0 %v1924
        %2034 = vmatpush2.msra.mxu0 %v1923
        %2035 = vmatprep.subr.mxu0 %v1922
        %2036 = vmatpush2.msra.mxu0 %v1921
        %2037 = vmatprep.subr.mxu0 %v1920
        %2038 = vmatpush2.msra.mxu0 %v1919
        %2039 = vmatprep.subr.mxu0 %v1918
        %2040 = vmatpush2.msra.mxu0 %v1917
        %2041 = vmatprep.subr.mxu0 %v1916
        %2042 = vmatpush2.msra.mxu0 %v1915
        %2043 = vmatprep.subr.mxu0 %v1914
        %2044 = vmatpush2.msra.mxu0 %v1913
        %2045 = vmatprep.subr.mxu0 %v1912
        %2046 = vmatpush2.msra.mxu0 %v1911
        %2047 = vmatprep.subr.mxu0 %v1910
        %2048 = vmatpush2.msra.mxu0 %v1909
        %2049 = vmatprep.mubr.f32.mxu0 %v1861
        %2050 = vmatmul.mubr.f32.gmra.mxu0 0.0
        %v2051 = vpop.f32.mrf.mxu0
        %v2052 = vadd.f32 %v1978, %v2051
        %v2053 = vpop.f32.mrf.mxu0
        %v2054 = vadd.f32 %v1982, %v2053
        %2055 = vmatprep.mubr.f32.mxu0 %v1862
        %2056 = vmatmul.mubr.f32.gmra.mxu0 0.0
        %v2057 = vpop.f32.mrf.mxu0
        %v2058 = vadd.f32 %v1978, %v2057
        %v2059 = vpop.f32.mrf.mxu0
        %v2060 = vadd.f32 %v1982, %v2059
        %2061 = vmatprep.mubr.f32.mxu0 %v1863
        %2062 = vmatmul.mubr.f32.gmra.mxu0 0.0
        %v2063 = vpop.f32.mrf.mxu0
        %v2064 = vadd.f32 %v1978, %v2063
        %v2065 = vpop.f32.mrf.mxu0
        %v2066 = vadd.f32 %v1982, %v2065
        %2067 = vmatprep.mubr.f32.mxu0 %v1864
        %2068 = vmatmul.mubr.f32.gmra.mxu0 0.0
        %v2069 = vpop.f32.mrf.mxu0
        %v2070 = vadd.f32 %v1978, %v2069
        %v2071 = vpop.f32.mrf.mxu0
        %v2072 = vadd.f32 %v1982, %v2071
        %2073 = vmatprep.mubr.f32.mxu0 %v1865
        %2074 = vmatmul.mubr.f32.gmra.mxu0 %v1861
        %v2075 = vpop.f32.mrf.mxu0
        %v2076 = vadd.f32 %v1978, %v2075
        %v2077 = vpop.f32.mrf.mxu0
        %v2078 = vadd.f32 %v1982, %v2077
        %2079 = vmatprep.mubr.f32.mxu0 %v1866
        %2080 = vmatmul.mubr.f32.gmra.mxu0 %v1862
        %v2081 = vpop.f32.mrf.mxu0
        %v2082 = vadd.f32 %v1978, %v2081
        %v2083 = vpop.f32.mrf.mxu0
        %v2084 = vadd.f32 %v1982, %v2083
        %2085 = vmatprep.mubr.f32.mxu0 %v1867
        %2086 = vmatmul.mubr.f32.gmra.mxu0 %v1863
        %v2087 = vpop.f32.mrf.mxu0
        %v2088 = vadd.f32 %v1978, %v2087
        %v2089 = vpop.f32.mrf.mxu0
        %v2090 = vadd.f32 %v1982, %v2089
        %2091 = vmatprep.mubr.f32.mxu0 %v1868
        %2092 = vmatmul.mubr.f32.gmra.mxu0 %v1864
        %v2093 = vpop.f32.mrf.mxu0
        %v2094 = vadd.f32 %v1978, %v2093
        %v2095 = vpop.f32.mrf.mxu0
        %v2096 = vadd.f32 %v1982, %v2095
        %2097 = vmatprep.mubr.f32.mxu0 %v1869
        %2098 = vmatmul.mubr.f32.gmra.mxu0 %v1865
        %v2099 = vpop.f32.mrf.mxu0
        %v2100 = vadd.f32 %v1978, %v2099
        %v2101 = vpop.f32.mrf.mxu0
        %v2102 = vadd.f32 %v1982, %v2101
        %2103 = vmatprep.mubr.f32.mxu0 %v1870
        %2104 = vmatmul.mubr.f32.gmra.mxu0 %v1866
        %v2105 = vpop.f32.mrf.mxu0
        %v2106 = vadd.f32 %v1978, %v2105
        %v2107 = vpop.f32.mrf.mxu0
        %v2108 = vadd.f32 %v1982, %v2107
        %2109 = vmatprep.mubr.f32.mxu0 %v1871
        %2110 = vmatmul.mubr.f32.gmra.mxu0 %v1867
        %v2111 = vpop.f32.mrf.mxu0
        %v2112 = vadd.f32 %v1978, %v2111
        %v2113 = vpop.f32.mrf.mxu0
        %v2114 = vadd.f32 %v1982, %v2113
        %2115 = vmatprep.mubr.f32.mxu0 %v1872
        %2116 = vmatmul.mubr.f32.gmra.mxu0 %v1868
        %v2117 = vpop.f32.mrf.mxu0
        %v2118 = vadd.f32 %v1978, %v2117
        %v2119 = vpop.f32.mrf.mxu0
        %v2120 = vadd.f32 %v1982, %v2119
        %2121 = vmatprep.mubr.f32.mxu0 %v1873
        %2122 = vmatmul.mubr.f32.gmra.mxu0 %v1869
        %v2123 = vpop.f32.mrf.mxu0
        %v2124 = vadd.f32 %v1978, %v2123
        %v2125 = vpop.f32.mrf.mxu0
        %v2126 = vadd.f32 %v1982, %v2125
        %2127 = vmatprep.mubr.f32.mxu0 %v1874
        %2128 = vmatmul.mubr.f32.gmra.mxu0 %v1870
        %v2129 = vpop.f32.mrf.mxu0
        %v2130 = vadd.f32 %v1978, %v2129
        %v2131 = vpop.f32.mrf.mxu0
        %v2132 = vadd.f32 %v1982, %v2131
        %2133 = vmatprep.mubr.f32.mxu0 %v1875
        %2134 = vmatmul.mubr.f32.gmra.mxu0 %v1871
        %v2135 = vpop.f32.mrf.mxu0
        %v2136 = vadd.f32 %v1978, %v2135
        %v2137 = vpop.f32.mrf.mxu0
        %v2138 = vadd.f32 %v1982, %v2137
        %2139 = vmatprep.mubr.f32.mxu0 %v1876
        %2140 = vmatmul.mubr.f32.gmra.mxu0 %v1872
        %v2141 = vpop.f32.mrf.mxu0
        %v2142 = vadd.f32 %v1978, %v2141
        %v2143 = vpop.f32.mrf.mxu0
        %v2144 = vadd.f32 %v1982, %v2143
        %2145 = vdwg.mxu0
        %2146 = vmatprep.subr.mxu0 %v1972
        %2147 = vmatpush1.msra.mxu0 %v1971
        %2148 = vmatprep.subr.mxu0 %v1970
        %2149 = vmatpush1.msra.mxu0 %v1969
        %2150 = vmatprep.subr.mxu0 %v1968
        %2151 = vmatpush1.msra.mxu0 %v1967
        %2152 = vmatprep.subr.mxu0 %v1966
        %2153 = vmatpush1.msra.mxu0 %v1965
        %2154 = vmatprep.subr.mxu0 %v1964
        %2155 = vmatpush1.msra.mxu0 %v1963
        %2156 = vmatprep.subr.mxu0 %v1962
        %2157 = vmatpush1.msra.mxu0 %v1961
        %2158 = vmatprep.subr.mxu0 %v1960
        %2159 = vmatpush1.msra.mxu0 %v1959
        %2160 = vmatprep.subr.mxu0 %v1958
        %2161 = vmatpush1.msra.mxu0 %v1957
        %2162 = vmatprep.subr.mxu0 %v1956
        %2163 = vmatpush1.msra.mxu0 %v1955
        %2164 = vmatprep.subr.mxu0 %v1954
        %2165 = vmatpush1.msra.mxu0 %v1953
        %2166 = vmatprep.subr.mxu0 %v1952
        %2167 = vmatpush1.msra.mxu0 %v1951
        %2168 = vmatprep.subr.mxu0 %v1950
        %2169 = vmatpush1.msra.mxu0 %v1949
        %2170 = vmatprep.subr.mxu0 %v1948
        %2171 = vmatpush1.msra.mxu0 %v1947
        %2172 = vmatprep.subr.mxu0 %v1946
        %2173 = vmatpush1.msra.mxu0 %v1945
        %2174 = vmatprep.subr.mxu0 %v1944
        %2175 = vmatpush1.msra.mxu0 %v1943
        %2176 = vmatprep.subr.mxu0 %v1942
        %2177 = vmatpush1.msra.mxu0 %v1941
        %2178 = vmatprep.subr.mxu0 0.0
        %2179 = vmatpush2.msra.mxu0 0.0
        %2180 = vmatprep.subr.mxu0 0.0
        %2181 = vmatpush2.msra.mxu0 0.0
        %2182 = vmatprep.subr.mxu0 0.0
        %2183 = vmatpush2.msra.mxu0 0.0
        %2184 = vmatprep.subr.mxu0 0.0
        %2185 = vmatpush2.msra.mxu0 0.0
        %2186 = vmatprep.subr.mxu0 0.0
        %2187 = vmatpush2.msra.mxu0 0.0
        %2188 = vmatprep.subr.mxu0 0.0
        %2189 = vmatpush2.msra.mxu0 0.0
        %2190 = vmatprep.subr.mxu0 0.0
        %2191 = vmatpush2.msra.mxu0 0.0
        %2192 = vmatprep.subr.mxu0 0.0
        %2193 = vmatpush2.msra.mxu0 0.0
        %2194 = vmatprep.subr.mxu0 0.0
        %2195 = vmatpush2.msra.mxu0 0.0
        %2196 = vmatprep.subr.mxu0 0.0
        %2197 = vmatpush2.msra.mxu0 0.0
        %2198 = vmatprep.subr.mxu0 0.0
        %2199 = vmatpush2.msra.mxu0 0.0
        %2200 = vmatprep.subr.mxu0 0.0
        %2201 = vmatpush2.msra.mxu0 0.0
        %2202 = vmatprep.subr.mxu0 0.0
        %2203 = vmatpush2.msra.mxu0 0.0
        %2204 = vmatprep.subr.mxu0 0.0
        %2205 = vmatpush2.msra.mxu0 0.0
        %2206 = vmatprep.subr.mxu0 0.0
        %2207 = vmatpush2.msra.mxu0 0.0
        %2208 = vmatprep.subr.mxu0 0.0
        %2209 = vmatpush2.msra.mxu0 0.0
        %2210 = vmatprep.mubr.f32.mxu0 0.0
        %2211 = vmatmul.mubr.f32.gmra.mxu0 %v1865
        %v2212 = vpop.f32.mrf.mxu0
        %v2213 = vadd.f32 %v2052, %v2212
        %v2214 = vpop.f32.mrf.mxu0
        %v2215 = vadd.f32 %v2054, %v2214
        %2216 = vmatprep.mubr.f32.mxu0 0.0
        %2217 = vmatmul.mubr.f32.gmra.mxu0 %v1866
        %v2218 = vpop.f32.mrf.mxu0
        %v2219 = vadd.f32 %v2058, %v2218
        %v2220 = vpop.f32.mrf.mxu0
        %v2221 = vadd.f32 %v2060, %v2220
        %2222 = vmatprep.mubr.f32.mxu0 0.0
        %2223 = vmatmul.mubr.f32.gmra.mxu0 %v1867
        %v2224 = vpop.f32.mrf.mxu0
        %v2225 = vadd.f32 %v2064, %v2224
        %v2226 = vpop.f32.mrf.mxu0
        %v2227 = vadd.f32 %v2066, %v2226
        %2228 = vmatprep.mubr.f32.mxu0 0.0
        %2229 = vmatmul.mubr.f32.gmra.mxu0 %v1868
        %v2230 = vpop.f32.mrf.mxu0
        %v2231 = vadd.f32 %v2070, %v2230
        %v2232 = vpop.f32.mrf.mxu0
        %v2233 = vadd.f32 %v2072, %v2232
        %2234 = vmatprep.mubr.f32.mxu0 0.0
        %2235 = vmatmul.mubr.f32.gmra.mxu0 %v1869
        %v2236 = vpop.f32.mrf.mxu0
        %v2237 = vadd.f32 %v2076, %v2236
        %v2238 = vpop.f32.mrf.mxu0
        %v2239 = vadd.f32 %v2078, %v2238
        %2240 = vmatprep.mubr.f32.mxu0 0.0
        %2241 = vmatmul.mubr.f32.gmra.mxu0 %v1870
        %v2242 = vpop.f32.mrf.mxu0
        %v2243 = vadd.f32 %v2082, %v2242
        %v2244 = vpop.f32.mrf.mxu0
        %v2245 = vadd.f32 %v2084, %v2244
        %2246 = vmatprep.mubr.f32.mxu0 0.0
        %2247 = vmatmul.mubr.f32.gmra.mxu0 %v1871
        %v2248 = vpop.f32.mrf.mxu0
        %v2249 = vadd.f32 %v2088, %v2248
        %v2250 = vpop.f32.mrf.mxu0
        %v2251 = vadd.f32 %v2090, %v2250
        %2252 = vmatprep.mubr.f32.mxu0 0.0
        %2253 = vmatmul.mubr.f32.gmra.mxu0 %v1872
        %v2254 = vpop.f32.mrf.mxu0
        %v2255 = vadd.f32 %v2094, %v2254
        %v2256 = vpop.f32.mrf.mxu0
        %v2257 = vadd.f32 %v2096, %v2256
        %2258 = vmatprep.mubr.f32.mxu0 0.0
        %2259 = vmatmul.mubr.f32.gmra.mxu0 %v1873
        %v2260 = vpop.f32.mrf.mxu0
        %v2261 = vadd.f32 %v2100, %v2260
        %v2262 = vpop.f32.mrf.mxu0
        %v2263 = vadd.f32 %v2102, %v2262
        %2264 = vmatprep.mubr.f32.mxu0 0.0
        %2265 = vmatmul.mubr.f32.gmra.mxu0 %v1874
        %v2266 = vpop.f32.mrf.mxu0
        %v2267 = vadd.f32 %v2106, %v2266
        %v2268 = vpop.f32.mrf.mxu0
        %v2269 = vadd.f32 %v2108, %v2268
        %2270 = vmatprep.mubr.f32.mxu0 0.0
        %2271 = vmatmul.mubr.f32.gmra.mxu0 %v1875
        %v2272 = vpop.f32.mrf.mxu0
        %v2273 = vadd.f32 %v2112, %v2272
        %v2274 = vpop.f32.mrf.mxu0
        %v2275 = vadd.f32 %v2114, %v2274
        %2276 = vmatprep.mubr.f32.mxu0 0.0
        %2277 = vmatmul.mubr.f32.gmra.mxu0 %v1876
        %v2278 = vpop.f32.mrf.mxu0
        %v2279 = vadd.f32 %v2118, %v2278
        %v2280 = vpop.f32.mrf.mxu0
        %v2281 = vadd.f32 %v2120, %v2280
        %2282 = vmatprep.mubr.f32.mxu0 0.0
        %2283 = vmatmul.mubr.f32.gmra.mxu0 0.0
        %v2284 = vpop.f32.mrf.mxu0
        %v2285 = vadd.f32 %v2124, %v2284
        %v2286 = vpop.f32.mrf.mxu0
        %v2287 = vadd.f32 %v2126, %v2286
        %2288 = vmatprep.mubr.f32.mxu0 0.0
        %2289 = vmatmul.mubr.f32.gmra.mxu0 0.0
        %v2290 = vpop.f32.mrf.mxu0
        %v2291 = vadd.f32 %v2130, %v2290
        %v2292 = vpop.f32.mrf.mxu0
        %v2293 = vadd.f32 %v2132, %v2292
        %2294 = vmatprep.mubr.f32.mxu0 0.0
        %2295 = vmatmul.mubr.f32.gmra.mxu0 0.0
        %v2296 = vpop.f32.mrf.mxu0
        %v2297 = vadd.f32 %v2136, %v2296
        %v2298 = vpop.f32.mrf.mxu0
        %v2299 = vadd.f32 %v2138, %v2298
        %2300 = vmatprep.mubr.f32.mxu0 0.0
        %2301 = vmatmul.mubr.f32.gmra.mxu0 0.0
        %v2302 = vpop.f32.mrf.mxu0
        %v2303 = vadd.f32 %v2142, %v2302
        %v2304 = vpop.f32.mrf.mxu0
        %v2305 = vadd.f32 %v2144, %v2304
        %2306 = vdwg.mxu0
        %v2307 = vmax.f32 %v2213, 0.0
        %v2308 = vmax.f32 %v2215, 0.0
        %v2309 = vmax.f32 %v2219, 0.0
        %v2310 = vmax.f32 %v2221, 0.0
        %v2311 = vmax.f32 %v2225, 0.0
        %v2312 = vmax.f32 %v2227, 0.0
        %v2313 = vmax.f32 %v2231, 0.0
        %v2314 = vmax.f32 %v2233, 0.0
        %v2315 = vmax.f32 %v2237, 0.0
        %v2316 = vmax.f32 %v2239, 0.0
        %v2317 = vmax.f32 %v2243, 0.0
        %v2318 = vmax.f32 %v2245, 0.0
        %v2319 = vmax.f32 %v2249, 0.0
        %v2320 = vmax.f32 %v2251, 0.0
        %v2321 = vmax.f32 %v2255, 0.0
        %v2322 = vmax.f32 %v2257, 0.0
        %v2323 = vmax.f32 %v2261, 0.0
        %v2324 = vmax.f32 %v2263, 0.0
        %v2325 = vmax.f32 %v2267, 0.0
        %v2326 = vmax.f32 %v2269, 0.0
        %v2327 = vmax.f32 %v2273, 0.0
        %v2328 = vmax.f32 %v2275, 0.0
        %v2329 = vmax.f32 %v2279, 0.0
        %v2330 = vmax.f32 %v2281, 0.0
        %v2331 = vmax.f32 %v2285, 0.0
        %v2332 = vmax.f32 %v2287, 0.0
        %v2333 = vmax.f32 %v2291, 0.0
        %v2334 = vmax.f32 %v2293, 0.0
        %v2335 = vmax.f32 %v2297, 0.0
        %v2336 = vmax.f32 %v2299, 0.0
        %v2337 = vmax.f32 %v2303, 0.0
        %v2338 = vmax.f32 %v2305, 0.0
        %v2339 = vmax.f32 %v2307, %v2315
        %v2340 = vmax.f32 %v2308, %v2316
        %v2341 = vmax.f32 %v2309, %v2317
        %v2342 = vmax.f32 %v2310, %v2318
        %v2343 = vmax.f32 %v2311, %v2319
        %v2344 = vmax.f32 %v2312, %v2320
        %v2345 = vmax.f32 %v2313, %v2321
        %v2346 = vmax.f32 %v2314, %v2322
        %v2347 = vmax.f32 %v2323, %v2331
        %v2348 = vmax.f32 %v2324, %v2332
        %v2349 = vmax.f32 %v2325, %v2333
        %v2350 = vmax.f32 %v2326, %v2334
        %v2351 = vmax.f32 %v2327, %v2335
        %v2352 = vmax.f32 %v2328, %v2336
        %v2353 = vmax.f32 %v2329, %v2337
        %v2354 = vmax.f32 %v2330, %v2338
        %v2355 = vld [vmem:[%s9] sm:$0xff]
        %v2356 = vld [vmem:[%s9 + $0x8] sm:$0xff]
        %v2357 = vld [vmem:[%s9 + $0x10] sm:$0xff]
        %v2358 = vld [vmem:[%s9 + $0x18] sm:$0xff]
        %v2359 = vld [vmem:[%s9 + $0x20] sm:$0xff]
        %v2360 = vld [vmem:[%s9 + $0x28] sm:$0xff]
        %v2361 = vld [vmem:[%s9 + $0x30] sm:$0xff]
        %v2362 = vld [vmem:[%s9 + $0x38] sm:$0xff]
        %v2363 = vld [vmem:[%s9 + $0x40] sm:$0xff]
        %v2364 = vld [vmem:[%s9 + $0x48] sm:$0xff]
        %v2365 = vld [vmem:[%s9 + $0x50] sm:$0xff]
        %v2366 = vld [vmem:[%s9 + $0x58] sm:$0xff]
        %v2367 = vld [vmem:[%s9 + $0x60] sm:$0xff]
        %v2368 = vld [vmem:[%s9 + $0x68] sm:$0xff]
        %v2369 = vld [vmem:[%s9 + $0x70] sm:$0xff]
        %v2370 = vld [vmem:[%s9 + $0x78] sm:$0xff]
        %v2371 = vld [vmem:[%s9 + $0x80] sm:$0xff]
        %v2372 = vld [vmem:[%s9 + $0x88] sm:$0xff]
        %v2373 = vld [vmem:[%s9 + $0x90] sm:$0xff]
        %v2374 = vld [vmem:[%s9 + $0x98] sm:$0xff]
        %v2375 = vld [vmem:[%s9 + $0xa0] sm:$0xff]
        %v2376 = vld [vmem:[%s9 + $0xa8] sm:$0xff]
        %v2377 = vld [vmem:[%s9 + $0xb0] sm:$0xff]
        %v2378 = vld [vmem:[%s9 + $0xb8] sm:$0xff]
        %v2379 = vld [vmem:[%s9 + $0xc0] sm:$0xff]
        %v2380 = vld [vmem:[%s9 + $0xc8] sm:$0xff]
        %v2381 = vld [vmem:[%s9 + $0xd0] sm:$0xff]
        %v2382 = vld [vmem:[%s9 + $0xd8] sm:$0xff]
        %v2383 = vld [vmem:[%s9 + $0xe0] sm:$0xff]
        %v2384 = vld [vmem:[%s9 + $0xe8] sm:$0xff]
        %v2385 = vld [vmem:[%s9 + $0xf0] sm:$0xff]
        %v2386 = vld [vmem:[%s9 + $0xf8] sm:$0xff]
        %v2387 = vld [vmem:[%s9 + $0x100] sm:$0xff]
        %v2388 = vld [vmem:[%s9 + $0x108] sm:$0xff]
        %v2389 = vld [vmem:[%s9 + $0x110] sm:$0xff]
        %v2390 = vld [vmem:[%s9 + $0x118] sm:$0xff]
        %v2391 = vld [vmem:[%s9 + $0x120] sm:$0xff]
        %v2392 = vld [vmem:[%s9 + $0x128] sm:$0xff]
        %v2393 = vld [vmem:[%s9 + $0x130] sm:$0xff]
        %v2394 = vld [vmem:[%s9 + $0x138] sm:$0xff]
        %v2395 = vld [vmem:[%s9 + $0x140] sm:$0xff]
        %v2396 = vld [vmem:[%s9 + $0x148] sm:$0xff]
        %v2397 = vld [vmem:[%s9 + $0x150] sm:$0xff]
        %v2398 = vld [vmem:[%s9 + $0x158] sm:$0xff]
        %v2399 = vld [vmem:[%s9 + $0x160] sm:$0xff]
        %v2400 = vld [vmem:[%s9 + $0x168] sm:$0xff]
        %v2401 = vld [vmem:[%s9 + $0x170] sm:$0xff]
        %v2402 = vld [vmem:[%s9 + $0x178] sm:$0xff]
        %v2403 = vld [vmem:[%s9 + $0x180] sm:$0xff]
        %v2404 = vld [vmem:[%s9 + $0x188] sm:$0xff]
        %v2405 = vld [vmem:[%s9 + $0x190] sm:$0xff]
        %v2406 = vld [vmem:[%s9 + $0x198] sm:$0xff]
        %v2407 = vld [vmem:[%s9 + $0x1a0] sm:$0xff]
        %v2408 = vld [vmem:[%s9 + $0x1a8] sm:$0xff]
        %v2409 = vld [vmem:[%s9 + $0x1b0] sm:$0xff]
        %v2410 = vld [vmem:[%s9 + $0x1b8] sm:$0xff]
        %v2411 = vld [vmem:[%s9 + $0x1c0] sm:$0xff]
        %v2412 = vld [vmem:[%s9 + $0x1c8] sm:$0xff]
        %v2413 = vld [vmem:[%s9 + $0x1d0] sm:$0xff]
        %v2414 = vld [vmem:[%s9 + $0x1d8] sm:$0xff]
        %v2415 = vld [vmem:[%s9 + $0x1e0] sm:$0xff]
        %v2416 = vld [vmem:[%s9 + $0x1e8] sm:$0xff]
        %v2417 = vld [vmem:[%s9 + $0x1f0] sm:$0xff]
        %v2418 = vld [vmem:[%s9 + $0x1f8] sm:$0xff]
        %v2419 = vld [vmem:[%s10] sm:$0x1]
        %v2421 = vlaneseq
        %v2422 = vshrl.u32 %v2421, 7
        %v2423 = vsub.s32 0, %v2422
        %v2424 = vrot.slane %v2419, %v2423
        %2426 = vmatprep.subr.mxu0 0.0
        %2427 = vmatpush1.msra.mxu0 %v2370
        %2428 = vmatprep.subr.mxu0 0.0
        %2429 = vmatpush1.msra.mxu0 %v2369
        %2430 = vmatprep.subr.mxu0 0.0
        %2431 = vmatpush1.msra.mxu0 %v2368
        %2432 = vmatprep.subr.mxu0 0.0
        %2433 = vmatpush1.msra.mxu0 %v2367
        %2434 = vmatprep.subr.mxu0 0.0
        %2435 = vmatpush1.msra.mxu0 %v2366
        %2436 = vmatprep.subr.mxu0 0.0
        %2437 = vmatpush1.msra.mxu0 %v2365
        %2438 = vmatprep.subr.mxu0 0.0
        %2439 = vmatpush1.msra.mxu0 %v2364
        %2440 = vmatprep.subr.mxu0 0.0
        %2441 = vmatpush1.msra.mxu0 %v2363
        %2442 = vmatprep.subr.mxu0 0.0
        %2443 = vmatpush1.msra.mxu0 %v2362
        %2444 = vmatprep.subr.mxu0 0.0
        %2445 = vmatpush1.msra.mxu0 %v2361
        %2446 = vmatprep.subr.mxu0 0.0
        %2447 = vmatpush1.msra.mxu0 %v2360
        %2448 = vmatprep.subr.mxu0 0.0
        %2449 = vmatpush1.msra.mxu0 %v2359
        %2450 = vmatprep.subr.mxu0 0.0
        %2451 = vmatpush1.msra.mxu0 %v2358
        %2452 = vmatprep.subr.mxu0 0.0
        %2453 = vmatpush1.msra.mxu0 %v2357
        %2454 = vmatprep.subr.mxu0 0.0
        %2455 = vmatpush1.msra.mxu0 %v2356
        %2456 = vmatprep.subr.mxu0 0.0
        %2457 = vmatpush1.msra.mxu0 %v2355
        %2458 = vmatprep.subr.mxu0 0.0
        %2459 = vmatpush2.msra.mxu0 %v2386
        %2460 = vmatprep.subr.mxu0 0.0
        %2461 = vmatpush2.msra.mxu0 %v2385
        %2462 = vmatprep.subr.mxu0 0.0
        %2463 = vmatpush2.msra.mxu0 %v2384
        %2464 = vmatprep.subr.mxu0 0.0
        %2465 = vmatpush2.msra.mxu0 %v2383
        %2466 = vmatprep.subr.mxu0 0.0
        %2467 = vmatpush2.msra.mxu0 %v2382
        %2468 = vmatprep.subr.mxu0 0.0
        %2469 = vmatpush2.msra.mxu0 %v2381
        %2470 = vmatprep.subr.mxu0 0.0
        %2471 = vmatpush2.msra.mxu0 %v2380
        %2472 = vmatprep.subr.mxu0 0.0
        %2473 = vmatpush2.msra.mxu0 %v2379
        %2474 = vmatprep.subr.mxu0 0.0
        %2475 = vmatpush2.msra.mxu0 %v2378
        %2476 = vmatprep.subr.mxu0 0.0
        %2477 = vmatpush2.msra.mxu0 %v2377
        %2478 = vmatprep.subr.mxu0 0.0
        %2479 = vmatpush2.msra.mxu0 %v2376
        %2480 = vmatprep.subr.mxu0 0.0
        %2481 = vmatpush2.msra.mxu0 %v2375
        %2482 = vmatprep.subr.mxu0 0.0
        %2483 = vmatpush2.msra.mxu0 %v2374
        %2484 = vmatprep.subr.mxu0 0.0
        %2485 = vmatpush2.msra.mxu0 %v2373
        %2486 = vmatprep.subr.mxu0 0.0
        %2487 = vmatpush2.msra.mxu0 %v2372
        %2488 = vmatprep.subr.mxu0 0.0
        %2489 = vmatpush2.msra.mxu0 %v2371
        %2490 = vmatprep.mubr.f32.mxu0 %v2340
        %2491 = vmatmul.mubr.f32.gmra.mxu0 %v2339
        %v2492 = vpop.f32.mrf.mxu0
        %v2493 = vadd.f32 %v2424, %v2492
        %v2494 = vpop.f32.mrf.mxu0
        %2495 = vmatprep.mubr.f32.mxu0 %v2342
        %2496 = vmatmul.mubr.f32.gmra.mxu0 %v2341
        %v2497 = vpop.f32.mrf.mxu0
        %v2498 = vadd.f32 %v2424, %v2497
        %v2499 = vpop.f32.mrf.mxu0
        %2500 = vmatprep.mubr.f32.mxu0 %v2344
        %2501 = vmatmul.mubr.f32.gmra.mxu0 %v2343
        %v2502 = vpop.f32.mrf.mxu0
        %v2503 = vadd.f32 %v2424, %v2502
        %v2504 = vpop.f32.mrf.mxu0
        %2505 = vmatprep.mubr.f32.mxu0 %v2346
        %2506 = vmatmul.mubr.f32.gmra.mxu0 %v2345
        %v2507 = vpop.f32.mrf.mxu0
        %v2508 = vadd.f32 %v2424, %v2507
        %v2509 = vpop.f32.mrf.mxu0
        %2510 = vdwg.mxu0
        %2511 = vmatprep.subr.mxu0 0.0
        %2512 = vmatpush1.msra.mxu0 %v2402
        %2513 = vmatprep.subr.mxu0 0.0
        %2514 = vmatpush1.msra.mxu0 %v2401
        %2515 = vmatprep.subr.mxu0 0.0
        %2516 = vmatpush1.msra.mxu0 %v2400
        %2517 = vmatprep.subr.mxu0 0.0
        %2518 = vmatpush1.msra.mxu0 %v2399
        %2519 = vmatprep.subr.mxu0 0.0
        %2520 = vmatpush1.msra.mxu0 %v2398
        %2521 = vmatprep.subr.mxu0 0.0
        %2522 = vmatpush1.msra.mxu0 %v2397
        %2523 = vmatprep.subr.mxu0 0.0
        %2524 = vmatpush1.msra.mxu0 %v2396
        %2525 = vmatprep.subr.mxu0 0.0
        %2526 = vmatpush1.msra.mxu0 %v2395
        %2527 = vmatprep.subr.mxu0 0.0
        %2528 = vmatpush1.msra.mxu0 %v2394
        %2529 = vmatprep.subr.mxu0 0.0
        %2530 = vmatpush1.msra.mxu0 %v2393
        %2531 = vmatprep.subr.mxu0 0.0
        %2532 = vmatpush1.msra.mxu0 %v2392
        %2533 = vmatprep.subr.mxu0 0.0
        %2534 = vmatpush1.msra.mxu0 %v2391
        %2535 = vmatprep.subr.mxu0 0.0
        %2536 = vmatpush1.msra.mxu0 %v2390
        %2537 = vmatprep.subr.mxu0 0.0
        %2538 = vmatpush1.msra.mxu0 %v2389
        %2539 = vmatprep.subr.mxu0 0.0
        %2540 = vmatpush1.msra.mxu0 %v2388
        %2541 = vmatprep.subr.mxu0 0.0
        %2542 = vmatpush1.msra.mxu0 %v2387
        %2543 = vmatprep.subr.mxu0 0.0
        %2544 = vmatpush2.msra.mxu0 %v2418
        %2545 = vmatprep.subr.mxu0 0.0
        %2546 = vmatpush2.msra.mxu0 %v2417
        %2547 = vmatprep.subr.mxu0 0.0
        %2548 = vmatpush2.msra.mxu0 %v2416
        %2549 = vmatprep.subr.mxu0 0.0
        %2550 = vmatpush2.msra.mxu0 %v2415
        %2551 = vmatprep.subr.mxu0 0.0
        %2552 = vmatpush2.msra.mxu0 %v2414
        %2553 = vmatprep.subr.mxu0 0.0
        %2554 = vmatpush2.msra.mxu0 %v2413
        %2555 = vmatprep.subr.mxu0 0.0
        %2556 = vmatpush2.msra.mxu0 %v2412
        %2557 = vmatprep.subr.mxu0 0.0
        %2558 = vmatpush2.msra.mxu0 %v2411
        %2559 = vmatprep.subr.mxu0 0.0
        %2560 = vmatpush2.msra.mxu0 %v2410
        %2561 = vmatprep.subr.mxu0 0.0
        %2562 = vmatpush2.msra.mxu0 %v2409
        %2563 = vmatprep.subr.mxu0 0.0
        %2564 = vmatpush2.msra.mxu0 %v2408
        %2565 = vmatprep.subr.mxu0 0.0
        %2566 = vmatpush2.msra.mxu0 %v2407
        %2567 = vmatprep.subr.mxu0 0.0
        %2568 = vmatpush2.msra.mxu0 %v2406
        %2569 = vmatprep.subr.mxu0 0.0
        %2570 = vmatpush2.msra.mxu0 %v2405
        %2571 = vmatprep.subr.mxu0 0.0
        %2572 = vmatpush2.msra.mxu0 %v2404
        %2573 = vmatprep.subr.mxu0 0.0
        %2574 = vmatpush2.msra.mxu0 %v2403
        %2575 = vmatprep.mubr.f32.mxu0 %v2348
        %2576 = vmatmul.mubr.f32.gmra.mxu0 %v2347
        %v2577 = vpop.f32.mrf.mxu0
        %v2578 = vadd.f32 %v2493, %v2577
        %v2579 = vpop.f32.mrf.mxu0
        %2580 = vmatprep.mubr.f32.mxu0 %v2350
        %2581 = vmatmul.mubr.f32.gmra.mxu0 %v2349
        %v2582 = vpop.f32.mrf.mxu0
        %v2583 = vadd.f32 %v2498, %v2582
        %v2584 = vpop.f32.mrf.mxu0
        %2585 = vmatprep.mubr.f32.mxu0 %v2352
        %2586 = vmatmul.mubr.f32.gmra.mxu0 %v2351
        %v2587 = vpop.f32.mrf.mxu0
        %v2588 = vadd.f32 %v2503, %v2587
        %v2589 = vpop.f32.mrf.mxu0
        %2590 = vmatprep.mubr.f32.mxu0 %v2354
        %2591 = vmatmul.mubr.f32.gmra.mxu0 %v2353
        %v2592 = vpop.f32.mrf.mxu0
        %v2593 = vadd.f32 %v2508, %v2592
        %v2594 = vpop.f32.mrf.mxu0
        %2595 = vdwg.mxu0
        %v2596 = vmax.f32 %v2578, 0.0
        %v2597 = vmax.f32 %v2583, 0.0
        %v2598 = vmax.f32 %v2588, 0.0
        %v2599 = vmax.f32 %v2593, 0.0
        %v2600 = vld [vmem:[%s11] sm:$0xff]
        %v2601 = vld [vmem:[%s11 + $0x8] sm:$0xff]
        %v2602 = vld [vmem:[%s11 + $0x10] sm:$0xff]
        %v2603 = vld [vmem:[%s11 + $0x18] sm:$0xff]
        %v2604 = vld [vmem:[%s11 + $0x20] sm:$0xff]
        %v2605 = vld [vmem:[%s11 + $0x28] sm:$0xff]
        %v2606 = vld [vmem:[%s11 + $0x30] sm:$0xff]
        %v2607 = vld [vmem:[%s11 + $0x38] sm:$0xff]
        %v2608 = vld [vmem:[%s11 + $0x40] sm:$0xff]
        %v2609 = vld [vmem:[%s11 + $0x48] sm:$0xff]
        %v2610 = vld [vmem:[%s11 + $0x50] sm:$0xff]
        %v2611 = vld [vmem:[%s11 + $0x58] sm:$0xff]
        %v2612 = vld [vmem:[%s11 + $0x60] sm:$0xff]
        %v2613 = vld [vmem:[%s11 + $0x68] sm:$0xff]
        %v2614 = vld [vmem:[%s11 + $0x70] sm:$0xff]
        %v2615 = vld [vmem:[%s11 + $0x78] sm:$0xff]
        %v2616 = vld [vmem:[%s12] sm:$0x1]
        %v2618 = vlaneseq
        %v2619 = vshrl.u32 %v2618, 7
        %v2620 = vsub.s32 0, %v2619
        %v2621 = vrot.slane %v2616, %v2620
        %2623 = vmatprep.subr.mxu0 0.0
        %2624 = vmatpush1.msra.mxu0 %v2615
        %2625 = vmatprep.subr.mxu0 0.0
        %2626 = vmatpush1.msra.mxu0 %v2614
        %2627 = vmatprep.subr.mxu0 0.0
        %2628 = vmatpush1.msra.mxu0 %v2613
        %2629 = vmatprep.subr.mxu0 0.0
        %2630 = vmatpush1.msra.mxu0 %v2612
        %2631 = vmatprep.subr.mxu0 0.0
        %2632 = vmatpush1.msra.mxu0 %v2611
        %2633 = vmatprep.subr.mxu0 0.0
        %2634 = vmatpush1.msra.mxu0 %v2610
        %2635 = vmatprep.subr.mxu0 0.0
        %2636 = vmatpush1.msra.mxu0 %v2609
        %2637 = vmatprep.subr.mxu0 0.0
        %2638 = vmatpush1.msra.mxu0 %v2608
        %2639 = vmatprep.subr.mxu0 0.0
        %2640 = vmatpush1.msra.mxu0 %v2607
        %2641 = vmatprep.subr.mxu0 0.0
        %2642 = vmatpush1.msra.mxu0 %v2606
        %2643 = vmatprep.subr.mxu0 0.0
        %2644 = vmatpush1.msra.mxu0 %v2605
        %2645 = vmatprep.subr.mxu0 0.0
        %2646 = vmatpush1.msra.mxu0 %v2604
        %2647 = vmatprep.subr.mxu0 0.0
        %2648 = vmatpush1.msra.mxu0 %v2603
        %2649 = vmatprep.subr.mxu0 0.0
        %2650 = vmatpush1.msra.mxu0 %v2602
        %2651 = vmatprep.subr.mxu0 0.0
        %2652 = vmatpush1.msra.mxu0 %v2601
        %2653 = vmatprep.subr.mxu0 0.0
        %2654 = vmatpush1.msra.mxu0 %v2600
        %2655 = vmatprep.subr.mxu0 0.0
        %2656 = vmatpush2.msra.mxu0 0.0
        %2657 = vmatprep.subr.mxu0 0.0
        %2658 = vmatpush2.msra.mxu0 0.0
        %2659 = vmatprep.subr.mxu0 0.0
        %2660 = vmatpush2.msra.mxu0 0.0
        %2661 = vmatprep.subr.mxu0 0.0
        %2662 = vmatpush2.msra.mxu0 0.0
        %2663 = vmatprep.subr.mxu0 0.0
        %2664 = vmatpush2.msra.mxu0 0.0
        %2665 = vmatprep.subr.mxu0 0.0
        %2666 = vmatpush2.msra.mxu0 0.0
        %2667 = vmatprep.subr.mxu0 0.0
        %2668 = vmatpush2.msra.mxu0 0.0
        %2669 = vmatprep.subr.mxu0 0.0
        %2670 = vmatpush2.msra.mxu0 0.0
        %2671 = vmatprep.subr.mxu0 0.0
        %2672 = vmatpush2.msra.mxu0 0.0
        %2673 = vmatprep.subr.mxu0 0.0
        %2674 = vmatpush2.msra.mxu0 0.0
        %2675 = vmatprep.subr.mxu0 0.0
        %2676 = vmatpush2.msra.mxu0 0.0
        %2677 = vmatprep.subr.mxu0 0.0
        %2678 = vmatpush2.msra.mxu0 0.0
        %2679 = vmatprep.subr.mxu0 0.0
        %2680 = vmatpush2.msra.mxu0 0.0
        %2681 = vmatprep.subr.mxu0 0.0
        %2682 = vmatpush2.msra.mxu0 0.0
        %2683 = vmatprep.subr.mxu0 0.0
        %2684 = vmatpush2.msra.mxu0 0.0
        %2685 = vmatprep.subr.mxu0 0.0
        %2686 = vmatpush2.msra.mxu0 0.0
        %2687 = vmatprep.mubr.f32.mxu0 0.0
        %2688 = vmatmul.mubr.f32.gmra.mxu0 %v2596
        %v2689 = vpop.f32.mrf.mxu0
        %v2690 = vadd.f32 %v2621, %v2689
        %v2691 = vpop.f32.mrf.mxu0
        %2692 = vmatprep.mubr.f32.mxu0 0.0
        %2693 = vmatmul.mubr.f32.gmra.mxu0 %v2597
        %v2694 = vpop.f32.mrf.mxu0
        %v2695 = vadd.f32 %v2621, %v2694
        %v2696 = vpop.f32.mrf.mxu0
        %2697 = vmatprep.mubr.f32.mxu0 0.0
        %2698 = vmatmul.mubr.f32.gmra.mxu0 %v2598
        %v2699 = vpop.f32.mrf.mxu0
        %v2700 = vadd.f32 %v2621, %v2699
        %v2701 = vpop.f32.mrf.mxu0
        %2702 = vmatprep.mubr.f32.mxu0 0.0
        %2703 = vmatmul.mubr.f32.gmra.mxu0 %v2599
        %v2704 = vpop.f32.mrf.mxu0
        %v2705 = vadd.f32 %v2621, %v2704
        %v2706 = vpop.f32.mrf.mxu0
        %2707 = vdwg.mxu0
        %2708 = vst [vmem:[%s464] sm:$0xff] %v2690
        %2709 = vst [vmem:[%s464 + $0x8] sm:$0xff] %v2695
        %2710 = vst [vmem:[%s464 + $0x10] sm:$0xff] %v2700
        %2711 = vst [vmem:[%s464 + $0x18] sm:$0xff] %v2705
        %s2712 = sand.u32 %s315, 1
        %s2713 = scalar_lea.sflag [#allocation4], %s2712
        %s2714 = sand.u32 %s315, 1
        %s2715 = smul.addr %s2714, 32
        %s2716 = scalar_lea.vmem [#allocation7], %s2715
        // Predicated region
        $region81: #{tpu_custom_call.1} parent=71 // pred_check
          %p2717 = pneg %p325
        $region82: #{tpu_custom_call.1} parent=71 // pred_check_branch
          %2719 = sbr.rel (%p2717) target = $region84
        $region83: #{tpu_custom_call.1} parent=71 // pred_region
          %s2720 = smul.u32 4, %s29
          %s2722 = ssub.s32 512, 512
          %2723 = vsyncadd %s2713, %s2722
          %s2724 = smul.addr %s2720, 128
          %s2725 = scalar_lea.hbm %s13, %s2724
          %s2726 = sshll.u32 %s2716, 4
          %s2727 = int_to_ptr.vmem [resolvable:$true] %s2726
          %2732 = dma.vmem_to_hbm [thread:$0]  %s2727, 512, %s2725, %s2713, 128, 128, 8
        $region84: #{tpu_custom_call.1} parent=71 // pred_fallthru
          _
      $region72: #{tpu_custom_call.1} parent=5 // pred_fallthru
        _
      %p2733 = scmp.le.s32.totalorder 2, %s24
      // Predicated region
      $region85: #{tpu_custom_call.1} parent=5 // pred_check
        %p2734 = pneg %p2733
      $region86: #{tpu_custom_call.1} parent=5 // pred_check_branch
        %2736 = sbr.rel (%p2734) target = $region88
      $region87: #{tpu_custom_call.1} parent=5 // pred_region
        %s2737 = ssub.s32 %s24, 2
        // Predicated region
        $region89: #{tpu_custom_call.1} parent=87 // pred_check
          %p2738 = pneg %p331
        $region90: #{tpu_custom_call.1} parent=87 // pred_check_branch
          %2740 = sbr.rel (%p2738) target = $region92
        $region91: #{tpu_custom_call.1} parent=87 // pred_region
          %s2741 = sand.u32 %s316, 1
          %s2742 = scalar_lea.sflag [#allocation4], %s2741
          %s2743 = sand.u32 %s316, 1
          %s2744 = smul.addr %s2743, 32
          %s2745 = scalar_lea.vmem [#allocation7], %s2744
          %2746 = dma.done %s2742, 512
        $region92: #{tpu_custom_call.1} parent=87 // pred_fallthru
          _
      $region88: #{tpu_custom_call.1} parent=5 // pred_fallthru
        _
    $region6: #{tpu_custom_call.1} parent=1 // loop_footer
      %s28 = sadd.s32 1, %s24
    $region7: #{tpu_custom_call.1} parent=1 // loop_footer_branch
      %23 = sbr.rel target = $region3
    $region8: #{tpu_custom_call.1} parent=1 // loop_exit
      _
    %2747 = vsyncpa [#allocation3], 1
    %s2748 = scalar_lea.sflag [#allocation3], 1
    %2749 = vsyncpa %s2748, 1
    %2750 = vsyncpa [#allocation6], 1
    %2751 = vsyncpa [#allocation4], 1
    %s2752 = scalar_lea.sflag [#allocation4], 1
    %2753 = vsyncpa %s2752, 1

</llo_original>
